<compile_context>
chip_gen: v6e
topology: v6e:2x2x1
jax: 0.10.0
libtpu: 0.0.40
codegen_flags: <defaults>
</compile_context>

<pallas_src>
import jax
import jax.numpy as jnp
from jax.experimental import pallas as pl
from jax.experimental.pallas import tpu as pltpu

NEG_SLOPE = 0.01   # nn.LeakyReLU() default negative_slope
BN_EPS = 1e-5      # nn.BatchNorm2d default eps
LANE = 128


def conv_block_kernel(xe_ref, xo_ref, w_ref, scale_ref, shift_ref, o_ref):
    # xe_ref / xo_ref: (NB, TILE_H+2, Wout+1, Cin)  bf16, even / odd padded W columns
    # w_ref:           (9*Cin+1, Cp)                bf16, im2col weight (+ bias row)
    # scale_ref:       (1, Cp)   f32, gamma / sqrt(running_var + eps)   (zero-padded)
    # shift_ref:       (1, Cp)   f32, beta - running_mean * scale       (zero-padded)
    # o_ref:           (NB, TILE_H, Wout, Cp)
    NB, THp2, We, Cin = xe_ref.shape
    TH, Wout = THp2 - 2, We - 1
    K = w_ref.shape[0]
    Cp = o_ref.shape[-1]

    xe = xe_ref[...]
    xo = xo_ref[...]
    ones = jnp.ones((NB, TH, Wout, 1), xe.dtype)   # bias column (bias row lives in w)

    def im2col(srcs):
        # srcs = [(array, col_offset)] for kw = 0, 1, 2.  Lane order (kh, kw, cin)
        # matches the (3,3,Cin,Cout) -> (9*Cin, Cout) weight reshape in the wrapper.
        taps = []
        for kh in range(3):
            for arr, off in srcs:
                taps.append(arr[:, kh:kh + TH, off:off + Wout, :])
        taps.append(ones)
        return jnp.concatenate(taps, axis=-1).reshape(NB * TH * Wout, K)

    w = w_ref[...]
    # Even output cols j=2u read padded cols (2u, 2u+1, 2u+2) = (xe[u], xo[u], xe[u+1]);
    # odd  output cols j=2u+1 read (2u+1, 2u+2, 2u+3)        = (xo[u], xe[u+1], xo[u+1]).
    acc_e = jnp.dot(im2col([(xe, 0), (xo, 0), (xe, 1)]), w,
                    preferred_element_type=jnp.float32)
    acc_o = jnp.dot(im2col([(xo, 0), (xe, 1), (xo, 1)]), w,
                    preferred_element_type=jnp.float32)

    scale = scale_ref[...]
    shift = shift_ref[...]

    def epilogue(a):                                    # f32 epilogue on all generations
        a = jnp.where(a > 0, a, NEG_SLOPE * a)          # LeakyReLU
        return a * scale + shift                        # BatchNorm2d (eval, folded)

    pooled = jnp.maximum(epilogue(acc_e), epilogue(acc_o))   # MaxPool2d([1, 2])
    o_ref[...] = pooled.reshape(NB, TH, Wout, Cp).astype(o_ref.dtype)
    # Dropout: identity in eval mode.


def conv_block(x, weight, bias, gamma, beta, running_mean, running_var,
               eps=BN_EPS):
    """x: (N, Cin, H, W) float32 NCHW (as PyTorch).  Returns (N, Cout, H, W//2)."""
    N, Cin, H, W = x.shape
    Cout = weight.shape[0]
    # TODO(synk): odd W would need PyTorch's floor behaviour (drop last column).
    assert W % 2 == 0
    Wout = W // 2

    # Tile sizes: keep per-step tiles small; sweep per generation in production
    # (roughly halve the v6e H-tile on v7x's 64 MiB VMEM).
    TILE_H = 8 if H % 8 == 0 else H
    n_h = H // TILE_H
    NB = 2 if N % 2 == 0 else 1            # batch elements per grid step

    Cp = ((Cout + LANE - 1) // LANE) * LANE   # lane-dense output channel count
    K = 9 * Cin + 1                           # im2col contraction depth (+ bias col)

    # ---- layout glue (plain JAX / XLA) ----
    x_nhwc = jnp.transpose(x, (0, 2, 3, 1))                       # (N,H,W,Cin)
    x_pad = jnp.pad(x_nhwc, ((0, 0), (1, 1), (1, 1), (0, 0)))     # (N,H+2,W+2,Cin)
    x_e = x_pad[:, :, 0::2, :]                                    # even padded cols
    x_o = x_pad[:, :, 1::2, :]                                    # odd  padded cols

    def slabs(a):  # overlapping H tiles with a 2-row halo, cast to bf16 for the MXU
        return jnp.stack(
            [a[:, i * TILE_H:i * TILE_H + TILE_H + 2] for i in range(n_h)],
            axis=1).astype(jnp.bfloat16)     # (N, n_h, TILE_H+2, Wout+1, Cin)

    xe_s, xo_s = slabs(x_e), slabs(x_o)

    # im2col weight: (kh, kw, cin) flattened onto K, conv bias appended as last row,
    # Cout zero-padded to Cp lanes.
    w = jnp.transpose(weight, (2, 3, 1, 0)).reshape(9 * Cin, Cout)
    w = jnp.concatenate([w, bias.reshape(1, Cout)], axis=0)         # (K, Cout)
    w = jnp.pad(w, ((0, 0), (0, Cp - Cout))).astype(jnp.bfloat16)   # (K, Cp)

    scale = gamma / jnp.sqrt(running_var + eps)
    shift = beta - running_mean * scale
    scale_p = jnp.pad(scale, (0, Cp - Cout)).reshape(1, Cp).astype(jnp.float32)
    shift_p = jnp.pad(shift, (0, Cp - Cout)).reshape(1, Cp).astype(jnp.float32)

    out_nhwc = pl.pallas_call(
        conv_block_kernel,
        out_shape=jax.ShapeDtypeStruct((N, H, Wout, Cp), x.dtype),
        grid=(N // NB, n_h),
        in_specs=[
            pl.BlockSpec((NB, None, TILE_H + 2, Wout + 1, Cin),
                         lambda nb, h: (nb, h, 0, 0, 0)),
            pl.BlockSpec((NB, None, TILE_H + 2, Wout + 1, Cin),
                         lambda nb, h: (nb, h, 0, 0, 0)),
            pl.BlockSpec((K, Cp), lambda nb, h: (0, 0)),
            pl.BlockSpec((1, Cp), lambda nb, h: (0, 0)),
            pl.BlockSpec((1, Cp), lambda nb, h: (0, 0)),
        ],
        out_specs=pl.BlockSpec((NB, TILE_H, Wout, Cp),
                               lambda nb, h: (nb, h, 0, 0)),
        compiler_params=pltpu.CompilerParams(
            dimension_semantics=("parallel", "parallel"),
            vmem_limit_bytes=32 * 1024 * 1024),
    )(xe_s, xo_s, w, scale_p, shift_p)

    out_nhwc = out_nhwc[..., :Cout]                 # strip Cout lane padding
    return jnp.transpose(out_nhwc, (0, 3, 1, 2))    # back to NCHW


def ref_conv_block(x, weight, bias, gamma, beta, running_mean, running_var,
                   eps=BN_EPS):
    """Pure-JAX f32 reference (eval-mode semantics), NCHW."""
    y = jax.lax.conv_general_dilated(
        x, weight, window_strides=(1, 1), padding=((1, 1), (1, 1)),
        dimension_numbers=("NCHW", "OIHW", "NCHW"))
    y = y + bias.reshape(1, -1, 1, 1)
    y = jnp.where(y > 0, y, NEG_SLOPE * y)
    scale = gamma / jnp.sqrt(running_var + eps)
    shift = beta - running_mean * scale
    y = y * scale.reshape(1, -1, 1, 1) + shift.reshape(1, -1, 1, 1)
    y = jnp.maximum(y[:, :, :, 0::2], y[:, :, :, 1::2])   # MaxPool2d([1, 2])
    return y


if __name__ == "__main__":
    key = jax.random.PRNGKey(0)
    N, Cin, H, W = 2, 4, 16, 16
    Cout = 8

    k_x, k_w, k_b, k_g, k_be, k_m, k_v = jax.random.split(key, 7)
    x = jax.random.normal(k_x, (N, Cin, H, W), dtype=jnp.float32)
    weight = 0.1 * jax.random.normal(k_w, (Cout, Cin, 3, 3), dtype=jnp.float32)
    bias = 0.1 * jax.random.normal(k_b, (Cout,), dtype=jnp.float32)
    # Non-trivial BatchNorm2d parameters / running buffers (eval mode).
    gamma = 1.0 + 0.1 * jax.random.normal(k_g, (Cout,), dtype=jnp.float32)
    beta = 0.1 * jax.random.normal(k_be, (Cout,), dtype=jnp.float32)
    running_mean = 0.1 * jax.random.normal(k_m, (Cout,), dtype=jnp.float32)
    running_var = 1.0 + 0.5 * jax.random.uniform(k_v, (Cout,), dtype=jnp.float32)

    out = conv_block(x, weight, bias, gamma, beta, running_mean, running_var)
    out = jax.block_until_ready(out)

    ref = ref_conv_block(x, weight, bias, gamma, beta, running_mean,
                         running_var)
    assert out.shape == (N, Cout, H, W // 2), out.shape
    # bf16 matmul operands with f32 accumulation -> relaxed tolerance vs f32 reference.
    assert jnp.allclose(out, ref, atol=2e-2, rtol=2e-2), "mismatch vs reference"

    print("KERNEL_OK")
</pallas_src>

<mosaic_0001>
module attributes {stable_mosaic.version = 11 : i64} {
  func.func @conv_block_kernel(%arg0: i32, %arg1: i32, %arg2: memref<2x1x10x9x4xbf16, #tpu.memory_space<vmem>>, %arg3: memref<2x1x10x9x4xbf16, #tpu.memory_space<vmem>>, %arg4: memref<37x128xbf16, #tpu.memory_space<vmem>>, %arg5: memref<1x128xf32, #tpu.memory_space<vmem>>, %arg6: memref<1x128xf32, #tpu.memory_space<vmem>>, %arg7: memref<2x8x8x128xf32, #tpu.memory_space<vmem>>) attributes {dimension_semantics = [#tpu.dimension_semantics<parallel>, #tpu.dimension_semantics<parallel>], iteration_bounds = array<i64: 1, 2>, scalar_prefetch = 0 : i64, scratch_operands = 0 : i64, tpu.core_type = #tpu.core_type<tc>, window_params = [{transform_indices = @transform_0, window_bounds = array<i64: 2, 1, 10, 9, 4>}, {transform_indices = @transform_1, window_bounds = array<i64: 2, 1, 10, 9, 4>}, {pipeline_mode = #tpu.pipeline_mode<synchronous>, transform_indices = @transform_2, window_bounds = array<i64: 37, 128>}, {pipeline_mode = #tpu.pipeline_mode<synchronous>, transform_indices = @transform_3, window_bounds = array<i64: 1, 128>}, {pipeline_mode = #tpu.pipeline_mode<synchronous>, transform_indices = @transform_4, window_bounds = array<i64: 1, 128>}, {transform_indices = @transform_5, window_bounds = array<i64: 2, 8, 8, 128>}]} {
    %c0 = arith.constant 0 : index
    %c0_0 = arith.constant 0 : index
    %c0_1 = arith.constant 0 : index
    %c0_2 = arith.constant 0 : index
    %c0_3 = arith.constant 0 : index
    %0 = vector.load %arg2[%c0, %c0_0, %c0_1, %c0_2, %c0_3] : memref<2x1x10x9x4xbf16, #tpu.memory_space<vmem>>, vector<2x1x10x9x4xbf16>
    %1 = vector.shape_cast %0 : vector<2x1x10x9x4xbf16> to vector<2x10x9x4xbf16>
    %c0_4 = arith.constant 0 : index
    %c0_5 = arith.constant 0 : index
    %c0_6 = arith.constant 0 : index
    %c0_7 = arith.constant 0 : index
    %c0_8 = arith.constant 0 : index
    %2 = vector.load %arg3[%c0_4, %c0_5, %c0_6, %c0_7, %c0_8] : memref<2x1x10x9x4xbf16, #tpu.memory_space<vmem>>, vector<2x1x10x9x4xbf16>
    %3 = vector.shape_cast %2 : vector<2x1x10x9x4xbf16> to vector<2x10x9x4xbf16>
    %cst = arith.constant 1.000000e+00 : bf16
    %4 = vector.broadcast %cst : bf16 to vector<2x8x8x1xbf16>
    %c0_9 = arith.constant 0 : index
    %c0_10 = arith.constant 0 : index
    %5 = vector.load %arg4[%c0_9, %c0_10] : memref<37x128xbf16, #tpu.memory_space<vmem>>, vector<37x128xbf16>
    %6 = vector.extract_strided_slice %1 {offsets = [0, 0, 0, 0], sizes = [2, 8, 8, 4], strides = [1, 1, 1, 1]} : vector<2x10x9x4xbf16> to vector<2x8x8x4xbf16>
    %7 = vector.extract_strided_slice %3 {offsets = [0, 0, 0, 0], sizes = [2, 8, 8, 4], strides = [1, 1, 1, 1]} : vector<2x10x9x4xbf16> to vector<2x8x8x4xbf16>
    %8 = vector.extract_strided_slice %1 {offsets = [0, 0, 1, 0], sizes = [2, 8, 8, 4], strides = [1, 1, 1, 1]} : vector<2x10x9x4xbf16> to vector<2x8x8x4xbf16>
    %9 = vector.extract_strided_slice %1 {offsets = [0, 1, 0, 0], sizes = [2, 8, 8, 4], strides = [1, 1, 1, 1]} : vector<2x10x9x4xbf16> to vector<2x8x8x4xbf16>
    %10 = vector.extract_strided_slice %3 {offsets = [0, 1, 0, 0], sizes = [2, 8, 8, 4], strides = [1, 1, 1, 1]} : vector<2x10x9x4xbf16> to vector<2x8x8x4xbf16>
    %11 = vector.extract_strided_slice %1 {offsets = [0, 1, 1, 0], sizes = [2, 8, 8, 4], strides = [1, 1, 1, 1]} : vector<2x10x9x4xbf16> to vector<2x8x8x4xbf16>
    %12 = vector.extract_strided_slice %1 {offsets = [0, 2, 0, 0], sizes = [2, 8, 8, 4], strides = [1, 1, 1, 1]} : vector<2x10x9x4xbf16> to vector<2x8x8x4xbf16>
    %13 = vector.extract_strided_slice %3 {offsets = [0, 2, 0, 0], sizes = [2, 8, 8, 4], strides = [1, 1, 1, 1]} : vector<2x10x9x4xbf16> to vector<2x8x8x4xbf16>
    %14 = vector.extract_strided_slice %1 {offsets = [0, 2, 1, 0], sizes = [2, 8, 8, 4], strides = [1, 1, 1, 1]} : vector<2x10x9x4xbf16> to vector<2x8x8x4xbf16>
    %15 = tpu.concatenate %6, %7, %8, %9, %10, %11, %12, %13, %14, %4 in 3 : vector<2x8x8x4xbf16>, vector<2x8x8x4xbf16>, vector<2x8x8x4xbf16>, vector<2x8x8x4xbf16>, vector<2x8x8x4xbf16>, vector<2x8x8x4xbf16>, vector<2x8x8x4xbf16>, vector<2x8x8x4xbf16>, vector<2x8x8x4xbf16>, vector<2x8x8x1xbf16> -> vector<2x8x8x37xbf16>
    %16 = vector.shape_cast %15 : vector<2x8x8x37xbf16> to vector<128x37xbf16>
    %cst_11 = arith.constant dense<0.000000e+00> : vector<128x128xf32>
    %17 = tpu.matmul %16, %5, %cst_11 {dimension_numbers = #tpu.dot_dimension_numbers<[1], [0], [0], [1], [0, 0, 1, 1], [], []>} : vector<128x37xbf16>, vector<37x128xbf16>, vector<128x128xf32> -> vector<128x128xf32>
    %18 = vector.extract_strided_slice %3 {offsets = [0, 0, 0, 0], sizes = [2, 8, 8, 4], strides = [1, 1, 1, 1]} : vector<2x10x9x4xbf16> to vector<2x8x8x4xbf16>
    %19 = vector.extract_strided_slice %1 {offsets = [0, 0, 1, 0], sizes = [2, 8, 8, 4], strides = [1, 1, 1, 1]} : vector<2x10x9x4xbf16> to vector<2x8x8x4xbf16>
    %20 = vector.extract_strided_slice %3 {offsets = [0, 0, 1, 0], sizes = [2, 8, 8, 4], strides = [1, 1, 1, 1]} : vector<2x10x9x4xbf16> to vector<2x8x8x4xbf16>
    %21 = vector.extract_strided_slice %3 {offsets = [0, 1, 0, 0], sizes = [2, 8, 8, 4], strides = [1, 1, 1, 1]} : vector<2x10x9x4xbf16> to vector<2x8x8x4xbf16>
    %22 = vector.extract_strided_slice %1 {offsets = [0, 1, 1, 0], sizes = [2, 8, 8, 4], strides = [1, 1, 1, 1]} : vector<2x10x9x4xbf16> to vector<2x8x8x4xbf16>
    %23 = vector.extract_strided_slice %3 {offsets = [0, 1, 1, 0], sizes = [2, 8, 8, 4], strides = [1, 1, 1, 1]} : vector<2x10x9x4xbf16> to vector<2x8x8x4xbf16>
    %24 = vector.extract_strided_slice %3 {offsets = [0, 2, 0, 0], sizes = [2, 8, 8, 4], strides = [1, 1, 1, 1]} : vector<2x10x9x4xbf16> to vector<2x8x8x4xbf16>
    %25 = vector.extract_strided_slice %1 {offsets = [0, 2, 1, 0], sizes = [2, 8, 8, 4], strides = [1, 1, 1, 1]} : vector<2x10x9x4xbf16> to vector<2x8x8x4xbf16>
    %26 = vector.extract_strided_slice %3 {offsets = [0, 2, 1, 0], sizes = [2, 8, 8, 4], strides = [1, 1, 1, 1]} : vector<2x10x9x4xbf16> to vector<2x8x8x4xbf16>
    %27 = tpu.concatenate %18, %19, %20, %21, %22, %23, %24, %25, %26, %4 in 3 : vector<2x8x8x4xbf16>, vector<2x8x8x4xbf16>, vector<2x8x8x4xbf16>, vector<2x8x8x4xbf16>, vector<2x8x8x4xbf16>, vector<2x8x8x4xbf16>, vector<2x8x8x4xbf16>, vector<2x8x8x4xbf16>, vector<2x8x8x4xbf16>, vector<2x8x8x1xbf16> -> vector<2x8x8x37xbf16>
    %28 = vector.shape_cast %27 : vector<2x8x8x37xbf16> to vector<128x37xbf16>
    %cst_12 = arith.constant dense<0.000000e+00> : vector<128x128xf32>
    %29 = tpu.matmul %28, %5, %cst_12 {dimension_numbers = #tpu.dot_dimension_numbers<[1], [0], [0], [1], [0, 0, 1, 1], [], []>} : vector<128x37xbf16>, vector<37x128xbf16>, vector<128x128xf32> -> vector<128x128xf32>
    %c0_13 = arith.constant 0 : index
    %c0_14 = arith.constant 0 : index
    %30 = vector.load %arg5[%c0_13, %c0_14] : memref<1x128xf32, #tpu.memory_space<vmem>>, vector<1x128xf32>
    %c0_15 = arith.constant 0 : index
    %c0_16 = arith.constant 0 : index
    %31 = vector.load %arg6[%c0_15, %c0_16] : memref<1x128xf32, #tpu.memory_space<vmem>>, vector<1x128xf32>
    %cst_17 = arith.constant 0.000000e+00 : f32
    %32 = vector.broadcast %cst_17 : f32 to vector<128x128xf32>
    %33 = arith.cmpf ogt, %17, %32 : vector<128x128xf32>
    %cst_18 = arith.constant 0.00999999977 : f32
    %34 = vector.broadcast %cst_18 : f32 to vector<128x128xf32>
    %35 = arith.mulf %34, %17 : vector<128x128xf32>
    %36 = arith.select %33, %17, %35 : vector<128x128xi1>, vector<128x128xf32>
    %37 = vector.broadcast %30 : vector<1x128xf32> to vector<128x128xf32>
    %38 = arith.mulf %36, %37 : vector<128x128xf32>
    %39 = vector.broadcast %31 : vector<1x128xf32> to vector<128x128xf32>
    %40 = arith.addf %38, %39 : vector<128x128xf32>
    %cst_19 = arith.constant 0.000000e+00 : f32
    %41 = vector.broadcast %cst_19 : f32 to vector<128x128xf32>
    %42 = arith.cmpf ogt, %29, %41 : vector<128x128xf32>
    %cst_20 = arith.constant 0.00999999977 : f32
    %43 = vector.broadcast %cst_20 : f32 to vector<128x128xf32>
    %44 = arith.mulf %43, %29 : vector<128x128xf32>
    %45 = arith.select %42, %29, %44 : vector<128x128xi1>, vector<128x128xf32>
    %46 = vector.broadcast %30 : vector<1x128xf32> to vector<128x128xf32>
    %47 = arith.mulf %45, %46 : vector<128x128xf32>
    %48 = vector.broadcast %31 : vector<1x128xf32> to vector<128x128xf32>
    %49 = arith.addf %47, %48 : vector<128x128xf32>
    %50 = arith.maximumf %40, %49 : vector<128x128xf32>
    %51 = vector.shape_cast %50 : vector<128x128xf32> to vector<2x8x8x128xf32>
    %c0_21 = arith.constant 0 : index
    %c0_22 = arith.constant 0 : index
    %c0_23 = arith.constant 0 : index
    %c0_24 = arith.constant 0 : index
    %52 = vector.load %arg7[%c0_21, %c0_22, %c0_23, %c0_24] : memref<2x8x8x128xf32, #tpu.memory_space<vmem>>, vector<2x8x8x128xf32>
    tpu.vector_store %arg7[%c0_21, %c0_22, %c0_23, %c0_24], %51 {strides = array<i32>} : memref<2x8x8x128xf32, #tpu.memory_space<vmem>>, vector<2x8x8x128xf32>,
    return
  }
  func.func @transform_0(%arg0: i32, %arg1: i32) -> (i32, i32, i32, i32, i32) {
    %c0_i32 = arith.constant 0 : i32
    %c0_i32_0 = arith.constant 0 : i32
    %c0_i32_1 = arith.constant 0 : i32
    %c0_i32_2 = arith.constant 0 : i32
    return %arg0, %arg1, %c0_i32, %c0_i32_0, %c0_i32_1 : i32, i32, i32, i32, i32
  }
  func.func @transform_1(%arg0: i32, %arg1: i32) -> (i32, i32, i32, i32, i32) {
    %c0_i32 = arith.constant 0 : i32
    %c0_i32_0 = arith.constant 0 : i32
    %c0_i32_1 = arith.constant 0 : i32
    %c0_i32_2 = arith.constant 0 : i32
    return %arg0, %arg1, %c0_i32, %c0_i32_0, %c0_i32_1 : i32, i32, i32, i32, i32
  }
  func.func @transform_2(%arg0: i32, %arg1: i32) -> (i32, i32) {
    %c0_i32 = arith.constant 0 : i32
    %c0_i32_0 = arith.constant 0 : i32
    %c0_i32_1 = arith.constant 0 : i32
    return %c0_i32, %c0_i32_0 : i32, i32
  }
  func.func @transform_3(%arg0: i32, %arg1: i32) -> (i32, i32) {
    %c0_i32 = arith.constant 0 : i32
    %c0_i32_0 = arith.constant 0 : i32
    %c0_i32_1 = arith.constant 0 : i32
    return %c0_i32, %c0_i32_0 : i32, i32
  }
  func.func @transform_4(%arg0: i32, %arg1: i32) -> (i32, i32) {
    %c0_i32 = arith.constant 0 : i32
    %c0_i32_0 = arith.constant 0 : i32
    %c0_i32_1 = arith.constant 0 : i32
    return %c0_i32, %c0_i32_0 : i32, i32
  }
  func.func @transform_5(%arg0: i32, %arg1: i32) -> (i32, i32, i32, i32) {
    %c0_i32 = arith.constant 0 : i32
    %c0_i32_0 = arith.constant 0 : i32
    %c0_i32_1 = arith.constant 0 : i32
    return %arg0, %arg1, %c0_i32, %c0_i32_0 : i32, i32, i32, i32
  }
}

</mosaic_0001>

<llo_original>
// kernel: tpu_custom_call.1
$region0: #{tpu_custom_call.1}
  #allocation0 [shape = 'u32[]', space=smem, size = 0x4, offset = 0x4, fixed_abs, tag = 'smem constant byte address 0x4 - core index']
  #allocation1 [shape = 'u32[144,128]{1,0:T(1,128)}', space=vmem, size = 0x12000, scoped, tag = 'internal scratch']
  #allocation6 [shape = 's32[]', space=sflag, size = 0x4, offset = 0, fixed_abs, tag = 'sflag constant byte address 0x0 - dummy sync flag']
  %s0 = inlined_call_operand.vmem [shape: bf16[2,2,10,9,4], index: 0, kind: input, shape index: {}]
  %s1 = inlined_call_operand.vmem [shape: bf16[2,2,10,9,4], index: 1, kind: input, shape index: {}]
  %s2 = inlined_call_operand.vmem [shape: bf16[37,128], index: 2, kind: input, shape index: {}]
  %s3 = inlined_call_operand.vmem [shape: f32[1,128], index: 3, kind: input, shape index: {}]
  %s4 = inlined_call_operand.vmem [shape: f32[1,128], index: 4, kind: input, shape index: {}]
  %s5 = inlined_call_operand.hbm [shape: f32[2,16,8,128], index: 5, kind: output, shape index: {}]
  %s6 = sld [smem:[#allocation0]]
  $region135: #{tpu_custom_call.1} parent=0
    _
  %s8 = ssub.s32 1, %s6
  %s9 = scalar_select 0, %s8, %s6
  $region1: #{tpu_custom_call.1} parent=0
    #allocation2 [shape = 'u8[163840]{0}', space=vmem, size = 0x28000, scoped, tag = 'input window, operand 0']
    #allocation3 [shape = 'u8[163840]{0}', space=vmem, size = 0x28000, scoped, tag = 'input window, operand 1']
    #allocation4 [shape = 'u8[131072]{0}', space=vmem, size = 0x20000, scoped, tag = 'output window, operand 0']
    #allocation5 [shape = 's32[2]{0}', space=sflag, size = 0x8, scoped, tag = 'scoped memory for tpu_custom_call.1']
    %10 = vsyncpa [#allocation5], 0
    %s11 = scalar_lea.sflag [#allocation5], 1
    %12 = vsyncpa %s11, 0
    loop: start=0, step=1, limit=4
    $region2: #{tpu_custom_call.1} parent=1 // loop_pre_header
      _
    $region3: #{tpu_custom_call.1} parent=1 // loop_header
      %s14 = sphi 0, %s18
      %p15 = scmp.ge.s32.totalorder %s14, 4
      %s21 = sphi 0, %s33
      %s22 = sphi 0, %s29
      %s23 = sphi 0, %s21
      %s24 = sphi 0, %s22
      %s25 = sphi 0, %s23
      %s26 = sphi 0, %s24
      %s38 = sphi 0, %s40
      %s41 = sphi 0, %s38
      %s42 = sphi 0, %s41
      %s58 = sphi 0, %s42
      %s66 = sphi 0, %s68
      %s69 = sphi 0, %s66
      %s70 = sphi 0, %s69
      %s86 = sphi 0, %s70
      %s90 = sphi 0, %s90
      %s92 = sphi 0, %s90
      %s93 = sphi 0, %s92
      %s107 = sphi 0, %s93
      %s111 = sphi 0, %s111
      %s113 = sphi 0, %s111
      %s114 = sphi 0, %s113
      %s128 = sphi 0, %s114
      %s132 = sphi 0, %s132
      %s134 = sphi 0, %s132
      %s135 = sphi 0, %s134
      %s149 = sphi 0, %s135
      %s157 = sphi 0, %s159
      %s160 = sphi 0, %s157
      %s161 = sphi 0, %s160
      %s177 = sphi 0, %s161
    $region4: #{tpu_custom_call.1} parent=1 // loop_header_branch
      %17 = sbr.rel (%p15) target = $region8
    $region5: #{tpu_custom_call.1} parent=1 // loop_body
      %s19 = ssub.s32 %s14, 1
      %s20 = ssub.s32 %s14, 2
      %s27 = sadd.s32 1, %s22
      %p28 = scmp.ge.s32.totalorder %s27, 2
      %s29 = scalar_select %p28, 0, %s27
      %s30 = sadd.s32 1, %s21
      %s31 = scalar_select %p28, %s30, %s21
      %p32 = scmp.ge.s32.totalorder %s31, 1
      %s33 = scalar_select %p32, 0, %s31
      %s34 = ssub.s32 %s21, %s33
      %s35 = ssub.s32 %s22, %s29
      %s36 = sor.u32 %s34, %s35
      %p37 = scmp.eq.s32.totalorder %s36, 0
      %s39 = sadd.s32 %s38, 1
      %s40 = scalar_select %p37, %s38, %s39
      %p43 = pneg %p37
      %p44 = scmp.eq.s32.totalorder %s14, 1
      %p45 = por %p43, %p44
      %p46 = scmp.ne.s32.totalorder %s38, %s41
      %p47 = scmp.eq.s32.totalorder %s14, 0
      %p48 = por %p46, %p47
      %p49 = scmp.ne.s32.totalorder %s38, %s41
      %p50 = scmp.eq.s32.totalorder %s19, 1
      %p51 = por %p49, %p50
      %p52 = scmp.ne.s32.totalorder %s41, %s42
      %p53 = scmp.eq.s32.totalorder %s19, 0
      %p54 = por %p52, %p53
      %p55 = scmp.ne.s32.totalorder %s41, %s42
      %p56 = scmp.eq.s32.totalorder %s20, 1
      %p57 = por %p55, %p56
      %p59 = scmp.ne.s32.totalorder %s42, %s58
      %p60 = scmp.eq.s32.totalorder %s20, 0
      %p61 = por %p59, %p60
      %s62 = ssub.s32 %s21, %s33
      %s63 = ssub.s32 %s22, %s29
      %s64 = sor.u32 %s62, %s63
      %p65 = scmp.eq.s32.totalorder %s64, 0
      %s67 = sadd.s32 %s66, 1
      %s68 = scalar_select %p65, %s66, %s67
      %p71 = pneg %p65
      %p72 = scmp.eq.s32.totalorder %s14, 1
      %p73 = por %p71, %p72
      %p74 = scmp.ne.s32.totalorder %s66, %s69
      %p75 = scmp.eq.s32.totalorder %s14, 0
      %p76 = por %p74, %p75
      %p77 = scmp.ne.s32.totalorder %s66, %s69
      %p78 = scmp.eq.s32.totalorder %s19, 1
      %p79 = por %p77, %p78
      %p80 = scmp.ne.s32.totalorder %s69, %s70
      %p81 = scmp.eq.s32.totalorder %s19, 0
      %p82 = por %p80, %p81
      %p83 = scmp.ne.s32.totalorder %s69, %s70
      %p84 = scmp.eq.s32.totalorder %s20, 1
      %p85 = por %p83, %p84
      %p87 = scmp.ne.s32.totalorder %s70, %s86
      %p88 = scmp.eq.s32.totalorder %s20, 0
      %p89 = por %p87, %p88
      %s91 = sadd.s32 %s90, 1
      %p94 = scmp.eq.s32.totalorder %s14, 1
      %p95 = scmp.ne.s32.totalorder %s90, %s92
      %p96 = scmp.eq.s32.totalorder %s14, 0
      %p97 = por %p95, %p96
      %p98 = scmp.ne.s32.totalorder %s90, %s92
      %p99 = scmp.eq.s32.totalorder %s19, 1
      %p100 = por %p98, %p99
      %p101 = scmp.ne.s32.totalorder %s92, %s93
      %p102 = scmp.eq.s32.totalorder %s19, 0
      %p103 = por %p101, %p102
      %p104 = scmp.ne.s32.totalorder %s92, %s93
      %p105 = scmp.eq.s32.totalorder %s20, 1
      %p106 = por %p104, %p105
      %p108 = scmp.ne.s32.totalorder %s93, %s107
      %p109 = scmp.eq.s32.totalorder %s20, 0
      %p110 = por %p108, %p109
      %s112 = sadd.s32 %s111, 1
      %p115 = scmp.eq.s32.totalorder %s14, 1
      %p116 = scmp.ne.s32.totalorder %s111, %s113
      %p117 = scmp.eq.s32.totalorder %s14, 0
      %p118 = por %p116, %p117
      %p119 = scmp.ne.s32.totalorder %s111, %s113
      %p120 = scmp.eq.s32.totalorder %s19, 1
      %p121 = por %p119, %p120
      %p122 = scmp.ne.s32.totalorder %s113, %s114
      %p123 = scmp.eq.s32.totalorder %s19, 0
      %p124 = por %p122, %p123
      %p125 = scmp.ne.s32.totalorder %s113, %s114
      %p126 = scmp.eq.s32.totalorder %s20, 1
      %p127 = por %p125, %p126
      %p129 = scmp.ne.s32.totalorder %s114, %s128
      %p130 = scmp.eq.s32.totalorder %s20, 0
      %p131 = por %p129, %p130
      %s133 = sadd.s32 %s132, 1
      %p136 = scmp.eq.s32.totalorder %s14, 1
      %p137 = scmp.ne.s32.totalorder %s132, %s134
      %p138 = scmp.eq.s32.totalorder %s14, 0
      %p139 = por %p137, %p138
      %p140 = scmp.ne.s32.totalorder %s132, %s134
      %p141 = scmp.eq.s32.totalorder %s19, 1
      %p142 = por %p140, %p141
      %p143 = scmp.ne.s32.totalorder %s134, %s135
      %p144 = scmp.eq.s32.totalorder %s19, 0
      %p145 = por %p143, %p144
      %p146 = scmp.ne.s32.totalorder %s134, %s135
      %p147 = scmp.eq.s32.totalorder %s20, 1
      %p148 = por %p146, %p147
      %p150 = scmp.ne.s32.totalorder %s135, %s149
      %p151 = scmp.eq.s32.totalorder %s20, 0
      %p152 = por %p150, %p151
      %s153 = ssub.s32 %s21, %s33
      %s154 = ssub.s32 %s22, %s29
      %s155 = sor.u32 %s153, %s154
      %p156 = scmp.eq.s32.totalorder %s155, 0
      %s158 = sadd.s32 %s157, 1
      %s159 = scalar_select %p156, %s157, %s158
      %p162 = pneg %p156
      %p163 = scmp.eq.s32.totalorder %s14, 1
      %p164 = por %p162, %p163
      %p165 = scmp.ne.s32.totalorder %s157, %s160
      %p166 = scmp.eq.s32.totalorder %s14, 0
      %p167 = por %p165, %p166
      %p168 = scmp.ne.s32.totalorder %s157, %s160
      %p169 = scmp.eq.s32.totalorder %s19, 1
      %p170 = por %p168, %p169
      %p171 = scmp.ne.s32.totalorder %s160, %s161
      %p172 = scmp.eq.s32.totalorder %s19, 0
      %p173 = por %p171, %p172
      %p174 = scmp.ne.s32.totalorder %s160, %s161
      %p175 = scmp.eq.s32.totalorder %s20, 1
      %p176 = por %p174, %p175
      %p178 = scmp.ne.s32.totalorder %s161, %s177
      %p179 = scmp.eq.s32.totalorder %s20, 0
      %p180 = por %p178, %p179
      %p181 = scmp.le.s32.totalorder 1, %s14
      %p182 = scmp.lt.s32.totalorder %s14, 3
      %p183 = pnand %p181, %p182
      %p184 = pneg %p183
      // Predicated region
      $region9: #{tpu_custom_call.1} parent=5 // pred_check
        _
      $region10: #{tpu_custom_call.1} parent=5 // pred_check_branch
        %186 = sbr.rel (%p183) target = $region12
      $region11: #{tpu_custom_call.1} parent=5 // pred_region
        %s187 = ssub.s32 %s14, 1
        // Predicated region
        $region13: #{tpu_custom_call.1} parent=11 // pred_check
          %p188 = pneg %p103
        $region14: #{tpu_custom_call.1} parent=11 // pred_check_branch
          %190 = sbr.rel (%p188) target = $region16
        $region15: #{tpu_custom_call.1} parent=11 // pred_region
          _
        $region16: #{tpu_custom_call.1} parent=11 // pred_fallthru
          _
        // Predicated region
        $region17: #{tpu_custom_call.1} parent=11 // pred_check
          %p191 = pneg %p124
        $region18: #{tpu_custom_call.1} parent=11 // pred_check_branch
          %193 = sbr.rel (%p191) target = $region20
        $region19: #{tpu_custom_call.1} parent=11 // pred_region
          _
        $region20: #{tpu_custom_call.1} parent=11 // pred_fallthru
          _
        // Predicated region
        $region21: #{tpu_custom_call.1} parent=11 // pred_check
          %p194 = pneg %p145
        $region22: #{tpu_custom_call.1} parent=11 // pred_check_branch
          %196 = sbr.rel (%p194) target = $region24
        $region23: #{tpu_custom_call.1} parent=11 // pred_region
          _
        $region24: #{tpu_custom_call.1} parent=11 // pred_fallthru
          _
      $region12: #{tpu_custom_call.1} parent=5 // pred_fallthru
        _
      %p197 = scmp.lt.s32.totalorder %s14, 2
      // Predicated region
      $region25: #{tpu_custom_call.1} parent=5 // pred_check
        %p198 = pneg %p197
      $region26: #{tpu_custom_call.1} parent=5 // pred_check_branch
        %200 = sbr.rel (%p198) target = $region28
      $region27: #{tpu_custom_call.1} parent=5 // pred_region
        // Predicated region
        $region29: #{tpu_custom_call.1} parent=27 // pred_check
          %p201 = pneg %p48
        $region30: #{tpu_custom_call.1} parent=27 // pred_check_branch
          %203 = sbr.rel (%p201) target = $region32
        $region31: #{tpu_custom_call.1} parent=27 // pred_region
          %s204 = sand.u32 %s38, 1
          %s205 = sand.u32 %s38, 1
          %s206 = smul.addr %s205, 160
          %s207 = scalar_lea.vmem [#allocation2], %s206
          %s208 = smul.u32 2, %s21
          %s209 = smul.addr %s22, 20
          %s210 = smul.addr %s208, 40
          %s211 = sadd.s32 %s209, %s210
          %s212 = smul.addr %s211, 4
          %s213 = scalar_lea.vmem %s0, %s212
          // Predicated region
          $region33: #{tpu_custom_call.1} parent=31 // pred_check
            _
          $region34: #{tpu_custom_call.1} parent=31 // pred_check_branch
            %215 = sbr.rel (0) target = $region36
          $region35: #{tpu_custom_call.1} parent=31 // pred_region
            // Predicated region
            $region37: #{tpu_custom_call.1} parent=35 // pred_check
              _
            $region38: #{tpu_custom_call.1} parent=35 // pred_check_branch
              %217 = sbr.rel target = $region40
            $region39: #{tpu_custom_call.1} parent=35 // pred_region
              // Predicated region
              $region52: #{tpu_custom_call.1} parent=39 // pred_check
                _
              $region53: #{tpu_custom_call.1} parent=39 // pred_check_branch
                %311 = sbr.rel (0) target = $region55
              $region54: #{tpu_custom_call.1} parent=39 // pred_region
                loop: start=0, step=1, limit=1
                $region56: #{tpu_custom_call.1} parent=54 // loop_pre_header
                  _
                $region57: #{tpu_custom_call.1} parent=54 // loop_header
                  %s313 = sphi 0, %s317
                  %p314 = scmp.ge.s32.totalorder %s313, 1
                  %s318 = sphi %s213, %s213
                  %s319 = sphi %s207, %s207
                $region58: #{tpu_custom_call.1} parent=54 // loop_header_branch
                  %316 = sbr.rel (%p314) target = $region62
                $region59: #{tpu_custom_call.1} parent=54 // loop_body
                  _
                $region60: #{tpu_custom_call.1} parent=54 // loop_footer
                  %s317 = sadd.s32 1, %s313
                $region61: #{tpu_custom_call.1} parent=54 // loop_footer_branch
                  %312 = sbr.rel target = $region57
                $region62: #{tpu_custom_call.1} parent=54 // loop_exit
                  _
                %s321 = ssub.s32 16, 1
                loop: start=0, step=1, limit=1
                $region63: #{tpu_custom_call.1} parent=54 // loop_pre_header
                  _
                $region64: #{tpu_custom_call.1} parent=54 // loop_header
                  %s323 = sphi 0, %s327
                  %p324 = scmp.ge.s32.totalorder %s323, 1
                  %s328 = sphi %s213, %s213
                  %s329 = sphi %s207, %s207
                $region65: #{tpu_custom_call.1} parent=54 // loop_header_branch
                  %326 = sbr.rel (%p324) target = $region69
                $region66: #{tpu_custom_call.1} parent=54 // loop_body
                  %v330 = vld [vmem:[%s328] sm:%s321]
                  %331 = vst [vmem:[%s329] sm:%s321] %v330
                  %v332 = vld [vmem:[%s328 + $0x4] sm:%s321]
                  %333 = vst [vmem:[%s329 + $0x4] sm:%s321] %v332
                  %v334 = vld [vmem:[%s328 + $0x8] sm:%s321]
                  %335 = vst [vmem:[%s329 + $0x8] sm:%s321] %v334
                  %v336 = vld [vmem:[%s328 + $0xc] sm:%s321]
                  %337 = vst [vmem:[%s329 + $0xc] sm:%s321] %v336
                  %v338 = vld [vmem:[%s328 + $0x10] sm:%s321]
                  %339 = vst [vmem:[%s329 + $0x10] sm:%s321] %v338
                  %v340 = vld [vmem:[%s328 + $0x14] sm:%s321]
                  %341 = vst [vmem:[%s329 + $0x14] sm:%s321] %v340
                  %v342 = vld [vmem:[%s328 + $0x18] sm:%s321]
                  %343 = vst [vmem:[%s329 + $0x18] sm:%s321] %v342
                  %v344 = vld [vmem:[%s328 + $0x1c] sm:%s321]
                  %345 = vst [vmem:[%s329 + $0x1c] sm:%s321] %v344
                  %v346 = vld [vmem:[%s328 + $0x20] sm:%s321]
                  %347 = vst [vmem:[%s329 + $0x20] sm:%s321] %v346
                  %v348 = vld [vmem:[%s328 + $0x24] sm:%s321]
                  %349 = vst [vmem:[%s329 + $0x24] sm:%s321] %v348
                  %v350 = vld [vmem:[%s328 + $0x28] sm:%s321]
                  %351 = vst [vmem:[%s329 + $0x28] sm:%s321] %v350
                  %v352 = vld [vmem:[%s328 + $0x2c] sm:%s321]
                  %353 = vst [vmem:[%s329 + $0x2c] sm:%s321] %v352
                  %v354 = vld [vmem:[%s328 + $0x30] sm:%s321]
                  %355 = vst [vmem:[%s329 + $0x30] sm:%s321] %v354
                  %v356 = vld [vmem:[%s328 + $0x34] sm:%s321]
                  %357 = vst [vmem:[%s329 + $0x34] sm:%s321] %v356
                  %v358 = vld [vmem:[%s328 + $0x38] sm:%s321]
                  %359 = vst [vmem:[%s329 + $0x38] sm:%s321] %v358
                  %v360 = vld [vmem:[%s328 + $0x3c] sm:%s321]
                  %361 = vst [vmem:[%s329 + $0x3c] sm:%s321] %v360
                  %v362 = vld [vmem:[%s328 + $0x40] sm:%s321]
                  %363 = vst [vmem:[%s329 + $0x40] sm:%s321] %v362
                  %v364 = vld [vmem:[%s328 + $0x44] sm:%s321]
                  %365 = vst [vmem:[%s329 + $0x44] sm:%s321] %v364
                  %v366 = vld [vmem:[%s328 + $0x48] sm:%s321]
                  %367 = vst [vmem:[%s329 + $0x48] sm:%s321] %v366
                  %v368 = vld [vmem:[%s328 + $0x4c] sm:%s321]
                  %369 = vst [vmem:[%s329 + $0x4c] sm:%s321] %v368
                  %v370 = vld [vmem:[%s328 + $0xa0] sm:%s321]
                  %371 = vst [vmem:[%s329 + $0x50] sm:%s321] %v370
                  %v372 = vld [vmem:[%s328 + $0xa4] sm:%s321]
                  %373 = vst [vmem:[%s329 + $0x54] sm:%s321] %v372
                  %v374 = vld [vmem:[%s328 + $0xa8] sm:%s321]
                  %375 = vst [vmem:[%s329 + $0x58] sm:%s321] %v374
                  %v376 = vld [vmem:[%s328 + $0xac] sm:%s321]
                  %377 = vst [vmem:[%s329 + $0x5c] sm:%s321] %v376
                  %v378 = vld [vmem:[%s328 + $0xb0] sm:%s321]
                  %379 = vst [vmem:[%s329 + $0x60] sm:%s321] %v378
                  %v380 = vld [vmem:[%s328 + $0xb4] sm:%s321]
                  %381 = vst [vmem:[%s329 + $0x64] sm:%s321] %v380
                  %v382 = vld [vmem:[%s328 + $0xb8] sm:%s321]
                  %383 = vst [vmem:[%s329 + $0x68] sm:%s321] %v382
                  %v384 = vld [vmem:[%s328 + $0xbc] sm:%s321]
                  %385 = vst [vmem:[%s329 + $0x6c] sm:%s321] %v384
                  %v386 = vld [vmem:[%s328 + $0xc0] sm:%s321]
                  %387 = vst [vmem:[%s329 + $0x70] sm:%s321] %v386
                  %v388 = vld [vmem:[%s328 + $0xc4] sm:%s321]
                  %389 = vst [vmem:[%s329 + $0x74] sm:%s321] %v388
                  %v390 = vld [vmem:[%s328 + $0xc8] sm:%s321]
                  %391 = vst [vmem:[%s329 + $0x78] sm:%s321] %v390
                  %v392 = vld [vmem:[%s328 + $0xcc] sm:%s321]
                  %393 = vst [vmem:[%s329 + $0x7c] sm:%s321] %v392
                  %v394 = vld [vmem:[%s328 + $0xd0] sm:%s321]
                  %395 = vst [vmem:[%s329 + $0x80] sm:%s321] %v394
                  %v396 = vld [vmem:[%s328 + $0xd4] sm:%s321]
                  %397 = vst [vmem:[%s329 + $0x84] sm:%s321] %v396
                  %v398 = vld [vmem:[%s328 + $0xd8] sm:%s321]
                  %399 = vst [vmem:[%s329 + $0x88] sm:%s321] %v398
                  %v400 = vld [vmem:[%s328 + $0xdc] sm:%s321]
                  %401 = vst [vmem:[%s329 + $0x8c] sm:%s321] %v400
                  %v402 = vld [vmem:[%s328 + $0xe0] sm:%s321]
                  %403 = vst [vmem:[%s329 + $0x90] sm:%s321] %v402
                  %v404 = vld [vmem:[%s328 + $0xe4] sm:%s321]
                  %405 = vst [vmem:[%s329 + $0x94] sm:%s321] %v404
                  %v406 = vld [vmem:[%s328 + $0xe8] sm:%s321]
                  %407 = vst [vmem:[%s329 + $0x98] sm:%s321] %v406
                  %v408 = vld [vmem:[%s328 + $0xec] sm:%s321]
                  %409 = vst [vmem:[%s329 + $0x9c] sm:%s321] %v408
                $region67: #{tpu_custom_call.1} parent=54 // loop_footer
                  %s327 = sadd.s32 1, %s323
                $region68: #{tpu_custom_call.1} parent=54 // loop_footer_branch
                  %322 = sbr.rel target = $region64
                $region69: #{tpu_custom_call.1} parent=54 // loop_exit
                  _
              $region55: #{tpu_custom_call.1} parent=39 // pred_fallthru
                _
            $region40: #{tpu_custom_call.1} parent=35 // pred_fallthru
              _
            // Predicated region
            $region41: #{tpu_custom_call.1} parent=35 // pred_check
              _
            $region42: #{tpu_custom_call.1} parent=35 // pred_check_branch
              %219 = sbr.rel (0) target = $region44
            $region43: #{tpu_custom_call.1} parent=35 // pred_region
              %s221 = ssub.s32 16, 1
              loop: start=0, step=1, limit=1
              $region45: #{tpu_custom_call.1} parent=43 // loop_pre_header
                _
              $region46: #{tpu_custom_call.1} parent=43 // loop_header
                %s223 = sphi 0, %s227
                %p224 = scmp.ge.s32.totalorder %s223, 1
                %s228 = sphi %s213, %s213
                %s229 = sphi %s207, %s207
              $region47: #{tpu_custom_call.1} parent=43 // loop_header_branch
                %226 = sbr.rel (%p224) target = $region51
              $region48: #{tpu_custom_call.1} parent=43 // loop_body
                %v230 = vld [vmem:[%s228] sm:%s221]
                %231 = vst [vmem:[%s229] sm:%s221] %v230
                %v232 = vld [vmem:[%s228 + $0x4] sm:%s221]
                %233 = vst [vmem:[%s229 + $0x4] sm:%s221] %v232
                %v234 = vld [vmem:[%s228 + $0x8] sm:%s221]
                %235 = vst [vmem:[%s229 + $0x8] sm:%s221] %v234
                %v236 = vld [vmem:[%s228 + $0xc] sm:%s221]
                %237 = vst [vmem:[%s229 + $0xc] sm:%s221] %v236
                %v238 = vld [vmem:[%s228 + $0x10] sm:%s221]
                %239 = vst [vmem:[%s229 + $0x10] sm:%s221] %v238
                %v240 = vld [vmem:[%s228 + $0x14] sm:%s221]
                %241 = vst [vmem:[%s229 + $0x14] sm:%s221] %v240
                %v242 = vld [vmem:[%s228 + $0x18] sm:%s221]
                %243 = vst [vmem:[%s229 + $0x18] sm:%s221] %v242
                %v244 = vld [vmem:[%s228 + $0x1c] sm:%s221]
                %245 = vst [vmem:[%s229 + $0x1c] sm:%s221] %v244
                %v246 = vld [vmem:[%s228 + $0x20] sm:%s221]
                %247 = vst [vmem:[%s229 + $0x20] sm:%s221] %v246
                %v248 = vld [vmem:[%s228 + $0x24] sm:%s221]
                %249 = vst [vmem:[%s229 + $0x24] sm:%s221] %v248
                %v250 = vld [vmem:[%s228 + $0x28] sm:%s221]
                %251 = vst [vmem:[%s229 + $0x28] sm:%s221] %v250
                %v252 = vld [vmem:[%s228 + $0x2c] sm:%s221]
                %253 = vst [vmem:[%s229 + $0x2c] sm:%s221] %v252
                %v254 = vld [vmem:[%s228 + $0x30] sm:%s221]
                %255 = vst [vmem:[%s229 + $0x30] sm:%s221] %v254
                %v256 = vld [vmem:[%s228 + $0x34] sm:%s221]
                %257 = vst [vmem:[%s229 + $0x34] sm:%s221] %v256
                %v258 = vld [vmem:[%s228 + $0x38] sm:%s221]
                %259 = vst [vmem:[%s229 + $0x38] sm:%s221] %v258
                %v260 = vld [vmem:[%s228 + $0x3c] sm:%s221]
                %261 = vst [vmem:[%s229 + $0x3c] sm:%s221] %v260
                %v262 = vld [vmem:[%s228 + $0x40] sm:%s221]
                %263 = vst [vmem:[%s229 + $0x40] sm:%s221] %v262
                %v264 = vld [vmem:[%s228 + $0x44] sm:%s221]
                %265 = vst [vmem:[%s229 + $0x44] sm:%s221] %v264
                %v266 = vld [vmem:[%s228 + $0x48] sm:%s221]
                %267 = vst [vmem:[%s229 + $0x48] sm:%s221] %v266
                %v268 = vld [vmem:[%s228 + $0x4c] sm:%s221]
                %269 = vst [vmem:[%s229 + $0x4c] sm:%s221] %v268
                %v270 = vld [vmem:[%s228 + $0xa0] sm:%s221]
                %271 = vst [vmem:[%s229 + $0x50] sm:%s221] %v270
                %v272 = vld [vmem:[%s228 + $0xa4] sm:%s221]
                %273 = vst [vmem:[%s229 + $0x54] sm:%s221] %v272
                %v274 = vld [vmem:[%s228 + $0xa8] sm:%s221]
                %275 = vst [vmem:[%s229 + $0x58] sm:%s221] %v274
                %v276 = vld [vmem:[%s228 + $0xac] sm:%s221]
                %277 = vst [vmem:[%s229 + $0x5c] sm:%s221] %v276
                %v278 = vld [vmem:[%s228 + $0xb0] sm:%s221]
                %279 = vst [vmem:[%s229 + $0x60] sm:%s221] %v278
                %v280 = vld [vmem:[%s228 + $0xb4] sm:%s221]
                %281 = vst [vmem:[%s229 + $0x64] sm:%s221] %v280
                %v282 = vld [vmem:[%s228 + $0xb8] sm:%s221]
                %283 = vst [vmem:[%s229 + $0x68] sm:%s221] %v282
                %v284 = vld [vmem:[%s228 + $0xbc] sm:%s221]
                %285 = vst [vmem:[%s229 + $0x6c] sm:%s221] %v284
                %v286 = vld [vmem:[%s228 + $0xc0] sm:%s221]
                %287 = vst [vmem:[%s229 + $0x70] sm:%s221] %v286
                %v288 = vld [vmem:[%s228 + $0xc4] sm:%s221]
                %289 = vst [vmem:[%s229 + $0x74] sm:%s221] %v288
                %v290 = vld [vmem:[%s228 + $0xc8] sm:%s221]
                %291 = vst [vmem:[%s229 + $0x78] sm:%s221] %v290
                %v292 = vld [vmem:[%s228 + $0xcc] sm:%s221]
                %293 = vst [vmem:[%s229 + $0x7c] sm:%s221] %v292
                %v294 = vld [vmem:[%s228 + $0xd0] sm:%s221]
                %295 = vst [vmem:[%s229 + $0x80] sm:%s221] %v294
                %v296 = vld [vmem:[%s228 + $0xd4] sm:%s221]
                %297 = vst [vmem:[%s229 + $0x84] sm:%s221] %v296
                %v298 = vld [vmem:[%s228 + $0xd8] sm:%s221]
                %299 = vst [vmem:[%s229 + $0x88] sm:%s221] %v298
                %v300 = vld [vmem:[%s228 + $0xdc] sm:%s221]
                %301 = vst [vmem:[%s229 + $0x8c] sm:%s221] %v300
                %v302 = vld [vmem:[%s228 + $0xe0] sm:%s221]
                %303 = vst [vmem:[%s229 + $0x90] sm:%s221] %v302
                %v304 = vld [vmem:[%s228 + $0xe4] sm:%s221]
                %305 = vst [vmem:[%s229 + $0x94] sm:%s221] %v304
                %v306 = vld [vmem:[%s228 + $0xe8] sm:%s221]
                %307 = vst [vmem:[%s229 + $0x98] sm:%s221] %v306
                %v308 = vld [vmem:[%s228 + $0xec] sm:%s221]
                %309 = vst [vmem:[%s229 + $0x9c] sm:%s221] %v308
              $region49: #{tpu_custom_call.1} parent=43 // loop_footer
                %s227 = sadd.s32 1, %s223
              $region50: #{tpu_custom_call.1} parent=43 // loop_footer_branch
                %222 = sbr.rel target = $region46
              $region51: #{tpu_custom_call.1} parent=43 // loop_exit
                _
            $region44: #{tpu_custom_call.1} parent=35 // pred_fallthru
              _
          $region36: #{tpu_custom_call.1} parent=31 // pred_fallthru
            _
          %410 = vnop
        $region32: #{tpu_custom_call.1} parent=27 // pred_fallthru
          _
        // Predicated region
        $region70: #{tpu_custom_call.1} parent=27 // pred_check
          %p411 = pneg %p76
        $region71: #{tpu_custom_call.1} parent=27 // pred_check_branch
          %413 = sbr.rel (%p411) target = $region73
        $region72: #{tpu_custom_call.1} parent=27 // pred_region
          %s414 = sand.u32 %s66, 1
          %s415 = sand.u32 %s66, 1
          %s416 = smul.addr %s415, 160
          %s417 = scalar_lea.vmem [#allocation3], %s416
          %s418 = smul.u32 2, %s21
          %s419 = smul.addr %s22, 20
          %s420 = smul.addr %s418, 40
          %s421 = sadd.s32 %s419, %s420
          %s422 = smul.addr %s421, 4
          %s423 = scalar_lea.vmem %s1, %s422
          // Predicated region
          $region74: #{tpu_custom_call.1} parent=72 // pred_check
            _
          $region75: #{tpu_custom_call.1} parent=72 // pred_check_branch
            %425 = sbr.rel (0) target = $region77
          $region76: #{tpu_custom_call.1} parent=72 // pred_region
            // Predicated region
            $region78: #{tpu_custom_call.1} parent=76 // pred_check
              _
            $region79: #{tpu_custom_call.1} parent=76 // pred_check_branch
              %427 = sbr.rel target = $region81
            $region80: #{tpu_custom_call.1} parent=76 // pred_region
              // Predicated region
              $region93: #{tpu_custom_call.1} parent=80 // pred_check
                _
              $region94: #{tpu_custom_call.1} parent=80 // pred_check_branch
                %521 = sbr.rel (0) target = $region96
              $region95: #{tpu_custom_call.1} parent=80 // pred_region
                loop: start=0, step=1, limit=1
                $region97: #{tpu_custom_call.1} parent=95 // loop_pre_header
                  _
                $region98: #{tpu_custom_call.1} parent=95 // loop_header
                  %s523 = sphi 0, %s527
                  %p524 = scmp.ge.s32.totalorder %s523, 1
                  %s528 = sphi %s423, %s423
                  %s529 = sphi %s417, %s417
                $region99: #{tpu_custom_call.1} parent=95 // loop_header_branch
                  %526 = sbr.rel (%p524) target = $region103
                $region100: #{tpu_custom_call.1} parent=95 // loop_body
                  _
                $region101: #{tpu_custom_call.1} parent=95 // loop_footer
                  %s527 = sadd.s32 1, %s523
                $region102: #{tpu_custom_call.1} parent=95 // loop_footer_branch
                  %522 = sbr.rel target = $region98
                $region103: #{tpu_custom_call.1} parent=95 // loop_exit
                  _
                %s531 = ssub.s32 16, 1
                loop: start=0, step=1, limit=1
                $region104: #{tpu_custom_call.1} parent=95 // loop_pre_header
                  _
                $region105: #{tpu_custom_call.1} parent=95 // loop_header
                  %s533 = sphi 0, %s537
                  %p534 = scmp.ge.s32.totalorder %s533, 1
                  %s538 = sphi %s423, %s423
                  %s539 = sphi %s417, %s417
                $region106: #{tpu_custom_call.1} parent=95 // loop_header_branch
                  %536 = sbr.rel (%p534) target = $region110
                $region107: #{tpu_custom_call.1} parent=95 // loop_body
                  %v540 = vld [vmem:[%s538] sm:%s531]
                  %541 = vst [vmem:[%s539] sm:%s531] %v540
                  %v542 = vld [vmem:[%s538 + $0x4] sm:%s531]
                  %543 = vst [vmem:[%s539 + $0x4] sm:%s531] %v542
                  %v544 = vld [vmem:[%s538 + $0x8] sm:%s531]
                  %545 = vst [vmem:[%s539 + $0x8] sm:%s531] %v544
                  %v546 = vld [vmem:[%s538 + $0xc] sm:%s531]
                  %547 = vst [vmem:[%s539 + $0xc] sm:%s531] %v546
                  %v548 = vld [vmem:[%s538 + $0x10] sm:%s531]
                  %549 = vst [vmem:[%s539 + $0x10] sm:%s531] %v548
                  %v550 = vld [vmem:[%s538 + $0x14] sm:%s531]
                  %551 = vst [vmem:[%s539 + $0x14] sm:%s531] %v550
                  %v552 = vld [vmem:[%s538 + $0x18] sm:%s531]
                  %553 = vst [vmem:[%s539 + $0x18] sm:%s531] %v552
                  %v554 = vld [vmem:[%s538 + $0x1c] sm:%s531]
                  %555 = vst [vmem:[%s539 + $0x1c] sm:%s531] %v554
                  %v556 = vld [vmem:[%s538 + $0x20] sm:%s531]
                  %557 = vst [vmem:[%s539 + $0x20] sm:%s531] %v556
                  %v558 = vld [vmem:[%s538 + $0x24] sm:%s531]
                  %559 = vst [vmem:[%s539 + $0x24] sm:%s531] %v558
                  %v560 = vld [vmem:[%s538 + $0x28] sm:%s531]
                  %561 = vst [vmem:[%s539 + $0x28] sm:%s531] %v560
                  %v562 = vld [vmem:[%s538 + $0x2c] sm:%s531]
                  %563 = vst [vmem:[%s539 + $0x2c] sm:%s531] %v562
                  %v564 = vld [vmem:[%s538 + $0x30] sm:%s531]
                  %565 = vst [vmem:[%s539 + $0x30] sm:%s531] %v564
                  %v566 = vld [vmem:[%s538 + $0x34] sm:%s531]
                  %567 = vst [vmem:[%s539 + $0x34] sm:%s531] %v566
                  %v568 = vld [vmem:[%s538 + $0x38] sm:%s531]
                  %569 = vst [vmem:[%s539 + $0x38] sm:%s531] %v568
                  %v570 = vld [vmem:[%s538 + $0x3c] sm:%s531]
                  %571 = vst [vmem:[%s539 + $0x3c] sm:%s531] %v570
                  %v572 = vld [vmem:[%s538 + $0x40] sm:%s531]
                  %573 = vst [vmem:[%s539 + $0x40] sm:%s531] %v572
                  %v574 = vld [vmem:[%s538 + $0x44] sm:%s531]
                  %575 = vst [vmem:[%s539 + $0x44] sm:%s531] %v574
                  %v576 = vld [vmem:[%s538 + $0x48] sm:%s531]
                  %577 = vst [vmem:[%s539 + $0x48] sm:%s531] %v576
                  %v578 = vld [vmem:[%s538 + $0x4c] sm:%s531]
                  %579 = vst [vmem:[%s539 + $0x4c] sm:%s531] %v578
                  %v580 = vld [vmem:[%s538 + $0xa0] sm:%s531]
                  %581 = vst [vmem:[%s539 + $0x50] sm:%s531] %v580
                  %v582 = vld [vmem:[%s538 + $0xa4] sm:%s531]
                  %583 = vst [vmem:[%s539 + $0x54] sm:%s531] %v582
                  %v584 = vld [vmem:[%s538 + $0xa8] sm:%s531]
                  %585 = vst [vmem:[%s539 + $0x58] sm:%s531] %v584
                  %v586 = vld [vmem:[%s538 + $0xac] sm:%s531]
                  %587 = vst [vmem:[%s539 + $0x5c] sm:%s531] %v586
                  %v588 = vld [vmem:[%s538 + $0xb0] sm:%s531]
                  %589 = vst [vmem:[%s539 + $0x60] sm:%s531] %v588
                  %v590 = vld [vmem:[%s538 + $0xb4] sm:%s531]
                  %591 = vst [vmem:[%s539 + $0x64] sm:%s531] %v590
                  %v592 = vld [vmem:[%s538 + $0xb8] sm:%s531]
                  %593 = vst [vmem:[%s539 + $0x68] sm:%s531] %v592
                  %v594 = vld [vmem:[%s538 + $0xbc] sm:%s531]
                  %595 = vst [vmem:[%s539 + $0x6c] sm:%s531] %v594
                  %v596 = vld [vmem:[%s538 + $0xc0] sm:%s531]
                  %597 = vst [vmem:[%s539 + $0x70] sm:%s531] %v596
                  %v598 = vld [vmem:[%s538 + $0xc4] sm:%s531]
                  %599 = vst [vmem:[%s539 + $0x74] sm:%s531] %v598
                  %v600 = vld [vmem:[%s538 + $0xc8] sm:%s531]
                  %601 = vst [vmem:[%s539 + $0x78] sm:%s531] %v600
                  %v602 = vld [vmem:[%s538 + $0xcc] sm:%s531]
                  %603 = vst [vmem:[%s539 + $0x7c] sm:%s531] %v602
                  %v604 = vld [vmem:[%s538 + $0xd0] sm:%s531]
                  %605 = vst [vmem:[%s539 + $0x80] sm:%s531] %v604
                  %v606 = vld [vmem:[%s538 + $0xd4] sm:%s531]
                  %607 = vst [vmem:[%s539 + $0x84] sm:%s531] %v606
                  %v608 = vld [vmem:[%s538 + $0xd8] sm:%s531]
                  %609 = vst [vmem:[%s539 + $0x88] sm:%s531] %v608
                  %v610 = vld [vmem:[%s538 + $0xdc] sm:%s531]
                  %611 = vst [vmem:[%s539 + $0x8c] sm:%s531] %v610
                  %v612 = vld [vmem:[%s538 + $0xe0] sm:%s531]
                  %613 = vst [vmem:[%s539 + $0x90] sm:%s531] %v612
                  %v614 = vld [vmem:[%s538 + $0xe4] sm:%s531]
                  %615 = vst [vmem:[%s539 + $0x94] sm:%s531] %v614
                  %v616 = vld [vmem:[%s538 + $0xe8] sm:%s531]
                  %617 = vst [vmem:[%s539 + $0x98] sm:%s531] %v616
                  %v618 = vld [vmem:[%s538 + $0xec] sm:%s531]
                  %619 = vst [vmem:[%s539 + $0x9c] sm:%s531] %v618
                $region108: #{tpu_custom_call.1} parent=95 // loop_footer
                  %s537 = sadd.s32 1, %s533
                $region109: #{tpu_custom_call.1} parent=95 // loop_footer_branch
                  %532 = sbr.rel target = $region105
                $region110: #{tpu_custom_call.1} parent=95 // loop_exit
                  _
              $region96: #{tpu_custom_call.1} parent=80 // pred_fallthru
                _
            $region81: #{tpu_custom_call.1} parent=76 // pred_fallthru
              _
            // Predicated region
            $region82: #{tpu_custom_call.1} parent=76 // pred_check
              _
            $region83: #{tpu_custom_call.1} parent=76 // pred_check_branch
              %429 = sbr.rel (0) target = $region85
            $region84: #{tpu_custom_call.1} parent=76 // pred_region
              %s431 = ssub.s32 16, 1
              loop: start=0, step=1, limit=1
              $region86: #{tpu_custom_call.1} parent=84 // loop_pre_header
                _
              $region87: #{tpu_custom_call.1} parent=84 // loop_header
                %s433 = sphi 0, %s437
                %p434 = scmp.ge.s32.totalorder %s433, 1
                %s438 = sphi %s423, %s423
                %s439 = sphi %s417, %s417
              $region88: #{tpu_custom_call.1} parent=84 // loop_header_branch
                %436 = sbr.rel (%p434) target = $region92
              $region89: #{tpu_custom_call.1} parent=84 // loop_body
                %v440 = vld [vmem:[%s438] sm:%s431]
                %441 = vst [vmem:[%s439] sm:%s431] %v440
                %v442 = vld [vmem:[%s438 + $0x4] sm:%s431]
                %443 = vst [vmem:[%s439 + $0x4] sm:%s431] %v442
                %v444 = vld [vmem:[%s438 + $0x8] sm:%s431]
                %445 = vst [vmem:[%s439 + $0x8] sm:%s431] %v444
                %v446 = vld [vmem:[%s438 + $0xc] sm:%s431]
                %447 = vst [vmem:[%s439 + $0xc] sm:%s431] %v446
                %v448 = vld [vmem:[%s438 + $0x10] sm:%s431]
                %449 = vst [vmem:[%s439 + $0x10] sm:%s431] %v448
                %v450 = vld [vmem:[%s438 + $0x14] sm:%s431]
                %451 = vst [vmem:[%s439 + $0x14] sm:%s431] %v450
                %v452 = vld [vmem:[%s438 + $0x18] sm:%s431]
                %453 = vst [vmem:[%s439 + $0x18] sm:%s431] %v452
                %v454 = vld [vmem:[%s438 + $0x1c] sm:%s431]
                %455 = vst [vmem:[%s439 + $0x1c] sm:%s431] %v454
                %v456 = vld [vmem:[%s438 + $0x20] sm:%s431]
                %457 = vst [vmem:[%s439 + $0x20] sm:%s431] %v456
                %v458 = vld [vmem:[%s438 + $0x24] sm:%s431]
                %459 = vst [vmem:[%s439 + $0x24] sm:%s431] %v458
                %v460 = vld [vmem:[%s438 + $0x28] sm:%s431]
                %461 = vst [vmem:[%s439 + $0x28] sm:%s431] %v460
                %v462 = vld [vmem:[%s438 + $0x2c] sm:%s431]
                %463 = vst [vmem:[%s439 + $0x2c] sm:%s431] %v462
                %v464 = vld [vmem:[%s438 + $0x30] sm:%s431]
                %465 = vst [vmem:[%s439 + $0x30] sm:%s431] %v464
                %v466 = vld [vmem:[%s438 + $0x34] sm:%s431]
                %467 = vst [vmem:[%s439 + $0x34] sm:%s431] %v466
                %v468 = vld [vmem:[%s438 + $0x38] sm:%s431]
                %469 = vst [vmem:[%s439 + $0x38] sm:%s431] %v468
                %v470 = vld [vmem:[%s438 + $0x3c] sm:%s431]
                %471 = vst [vmem:[%s439 + $0x3c] sm:%s431] %v470
                %v472 = vld [vmem:[%s438 + $0x40] sm:%s431]
                %473 = vst [vmem:[%s439 + $0x40] sm:%s431] %v472
                %v474 = vld [vmem:[%s438 + $0x44] sm:%s431]
                %475 = vst [vmem:[%s439 + $0x44] sm:%s431] %v474
                %v476 = vld [vmem:[%s438 + $0x48] sm:%s431]
                %477 = vst [vmem:[%s439 + $0x48] sm:%s431] %v476
                %v478 = vld [vmem:[%s438 + $0x4c] sm:%s431]
                %479 = vst [vmem:[%s439 + $0x4c] sm:%s431] %v478
                %v480 = vld [vmem:[%s438 + $0xa0] sm:%s431]
                %481 = vst [vmem:[%s439 + $0x50] sm:%s431] %v480
                %v482 = vld [vmem:[%s438 + $0xa4] sm:%s431]
                %483 = vst [vmem:[%s439 + $0x54] sm:%s431] %v482
                %v484 = vld [vmem:[%s438 + $0xa8] sm:%s431]
                %485 = vst [vmem:[%s439 + $0x58] sm:%s431] %v484
                %v486 = vld [vmem:[%s438 + $0xac] sm:%s431]
                %487 = vst [vmem:[%s439 + $0x5c] sm:%s431] %v486
                %v488 = vld [vmem:[%s438 + $0xb0] sm:%s431]
                %489 = vst [vmem:[%s439 + $0x60] sm:%s431] %v488
                %v490 = vld [vmem:[%s438 + $0xb4] sm:%s431]
                %491 = vst [vmem:[%s439 + $0x64] sm:%s431] %v490
                %v492 = vld [vmem:[%s438 + $0xb8] sm:%s431]
                %493 = vst [vmem:[%s439 + $0x68] sm:%s431] %v492
                %v494 = vld [vmem:[%s438 + $0xbc] sm:%s431]
                %495 = vst [vmem:[%s439 + $0x6c] sm:%s431] %v494
                %v496 = vld [vmem:[%s438 + $0xc0] sm:%s431]
                %497 = vst [vmem:[%s439 + $0x70] sm:%s431] %v496
                %v498 = vld [vmem:[%s438 + $0xc4] sm:%s431]
                %499 = vst [vmem:[%s439 + $0x74] sm:%s431] %v498
                %v500 = vld [vmem:[%s438 + $0xc8] sm:%s431]
                %501 = vst [vmem:[%s439 + $0x78] sm:%s431] %v500
                %v502 = vld [vmem:[%s438 + $0xcc] sm:%s431]
                %503 = vst [vmem:[%s439 + $0x7c] sm:%s431] %v502
                %v504 = vld [vmem:[%s438 + $0xd0] sm:%s431]
                %505 = vst [vmem:[%s439 + $0x80] sm:%s431] %v504
                %v506 = vld [vmem:[%s438 + $0xd4] sm:%s431]
                %507 = vst [vmem:[%s439 + $0x84] sm:%s431] %v506
                %v508 = vld [vmem:[%s438 + $0xd8] sm:%s431]
                %509 = vst [vmem:[%s439 + $0x88] sm:%s431] %v508
                %v510 = vld [vmem:[%s438 + $0xdc] sm:%s431]
                %511 = vst [vmem:[%s439 + $0x8c] sm:%s431] %v510
                %v512 = vld [vmem:[%s438 + $0xe0] sm:%s431]
                %513 = vst [vmem:[%s439 + $0x90] sm:%s431] %v512
                %v514 = vld [vmem:[%s438 + $0xe4] sm:%s431]
                %515 = vst [vmem:[%s439 + $0x94] sm:%s431] %v514
                %v516 = vld [vmem:[%s438 + $0xe8] sm:%s431]
                %517 = vst [vmem:[%s439 + $0x98] sm:%s431] %v516
                %v518 = vld [vmem:[%s438 + $0xec] sm:%s431]
                %519 = vst [vmem:[%s439 + $0x9c] sm:%s431] %v518
              $region90: #{tpu_custom_call.1} parent=84 // loop_footer
                %s437 = sadd.s32 1, %s433
              $region91: #{tpu_custom_call.1} parent=84 // loop_footer_branch
                %432 = sbr.rel target = $region87
              $region92: #{tpu_custom_call.1} parent=84 // loop_exit
                _
            $region85: #{tpu_custom_call.1} parent=76 // pred_fallthru
              _
          $region77: #{tpu_custom_call.1} parent=72 // pred_fallthru
            _
          %620 = vnop
        $region73: #{tpu_custom_call.1} parent=27 // pred_fallthru
          _
      $region28: #{tpu_custom_call.1} parent=5 // pred_fallthru
        _
      %p621 = scmp.le.s32.totalorder 1, %s14
      %p622 = scmp.lt.s32.totalorder %s14, 3
      %p623 = pnand %p621, %p622
      %p624 = pneg %p623
      // Predicated region
      $region111: #{tpu_custom_call.1} parent=5 // pred_check
        _
      $region112: #{tpu_custom_call.1} parent=5 // pred_check_branch
        %626 = sbr.rel (%p623) target = $region114
      $region113: #{tpu_custom_call.1} parent=5 // pred_region
        %s627 = ssub.s32 %s14, 1
        %s628 = sand.u32 %s41, 1
        %s629 = sand.u32 %s41, 1
        %s630 = smul.addr %s629, 160
        %s631 = scalar_lea.vmem [#allocation2], %s630
        // Predicated region
        $region115: #{tpu_custom_call.1} parent=113 // pred_check
          %p632 = pneg %p54
        $region116: #{tpu_custom_call.1} parent=113 // pred_check_branch
          %634 = sbr.rel (%p632) target = $region118
        $region117: #{tpu_custom_call.1} parent=113 // pred_region
          _
        $region118: #{tpu_custom_call.1} parent=113 // pred_fallthru
          _
        %s635 = sand.u32 %s69, 1
        %s636 = sand.u32 %s69, 1
        %s637 = smul.addr %s636, 160
        %s638 = scalar_lea.vmem [#allocation3], %s637
        // Predicated region
        $region119: #{tpu_custom_call.1} parent=113 // pred_check
          %p639 = pneg %p82
        $region120: #{tpu_custom_call.1} parent=113 // pred_check_branch
          %641 = sbr.rel (%p639) target = $region122
        $region121: #{tpu_custom_call.1} parent=113 // pred_region
          _
        $region122: #{tpu_custom_call.1} parent=113 // pred_fallthru
          _
        %s642 = sand.u32 %s41, 1
        %s643 = sand.u32 %s41, 1
        %s644 = smul.addr %s643, 160
        %s645 = scalar_lea.vmem [#allocation2], %s644
        %p646 = pneg %p54
        %p647 = pneg %p51
        %s648 = sand.u32 %s69, 1
        %s649 = sand.u32 %s69, 1
        %s650 = smul.addr %s649, 160
        %s651 = scalar_lea.vmem [#allocation3], %s650
        %p652 = pneg %p82
        %p653 = pneg %p79
        %p654 = pneg %p103
        %p655 = pneg %p100
        %p656 = pneg %p124
        %p657 = pneg %p121
        %p658 = pneg %p145
        %p659 = pneg %p142
        %p660 = pneg %p173
        %p661 = pneg %p170
        %s662 = sand.u32 %s160, 1
        %s663 = scalar_lea.sflag [#allocation5], %s662
        %s664 = sand.u32 %s160, 1
        %s665 = smul.addr %s664, 128
        %s666 = scalar_lea.vmem [#allocation4], %s665
        %s667 = smul.u32 2, %s23
        %s668 = smul.u32 2, %s23
        %s669 = smul.u32 2, %s23
        %s670 = smul.u32 8, %s24
        %v673 = vld [vmem:[%s631] sm:$0xf]
        %v674 = vld [vmem:[%s631 + $0x4] sm:$0x1]
        %v675 = vld [vmem:[%s631 + $0x8] sm:$0xf]
        %v676 = vld [vmem:[%s631 + $0xc] sm:$0x1]
        %v677 = vld [vmem:[%s631 + $0x10] sm:$0xf]
        %v678 = vld [vmem:[%s631 + $0x14] sm:$0x1]
        %v679 = vld [vmem:[%s631 + $0x18] sm:$0xf]
        %v680 = vld [vmem:[%s631 + $0x1c] sm:$0x1]
        %v681 = vld [vmem:[%s631 + $0x20] sm:$0xf]
        %v682 = vld [vmem:[%s631 + $0x24] sm:$0x1]
        %v683 = vld [vmem:[%s631 + $0x28] sm:$0xf]
        %v684 = vld [vmem:[%s631 + $0x2c] sm:$0x1]
        %v685 = vld [vmem:[%s631 + $0x30] sm:$0xf]
        %v686 = vld [vmem:[%s631 + $0x34] sm:$0x1]
        %v687 = vld [vmem:[%s631 + $0x38] sm:$0xf]
        %v688 = vld [vmem:[%s631 + $0x3c] sm:$0x1]
        %v689 = vld [vmem:[%s631 + $0x40] sm:$0xf]
        %v690 = vld [vmem:[%s631 + $0x44] sm:$0x1]
        %v691 = vld [vmem:[%s631 + $0x48] sm:$0xf]
        %v692 = vld [vmem:[%s631 + $0x4c] sm:$0x1]
        %v693 = vld [vmem:[%s631 + $0x50] sm:$0xf]
        %v694 = vld [vmem:[%s631 + $0x54] sm:$0x1]
        %v695 = vld [vmem:[%s631 + $0x58] sm:$0xf]
        %v696 = vld [vmem:[%s631 + $0x5c] sm:$0x1]
        %v697 = vld [vmem:[%s631 + $0x60] sm:$0xf]
        %v698 = vld [vmem:[%s631 + $0x64] sm:$0x1]
        %v699 = vld [vmem:[%s631 + $0x68] sm:$0xf]
        %v700 = vld [vmem:[%s631 + $0x6c] sm:$0x1]
        %v701 = vld [vmem:[%s631 + $0x70] sm:$0xf]
        %v702 = vld [vmem:[%s631 + $0x74] sm:$0x1]
        %v703 = vld [vmem:[%s631 + $0x78] sm:$0xf]
        %v704 = vld [vmem:[%s631 + $0x7c] sm:$0x1]
        %v705 = vld [vmem:[%s631 + $0x80] sm:$0xf]
        %v706 = vld [vmem:[%s631 + $0x84] sm:$0x1]
        %v707 = vld [vmem:[%s631 + $0x88] sm:$0xf]
        %v708 = vld [vmem:[%s631 + $0x8c] sm:$0x1]
        %v709 = vld [vmem:[%s631 + $0x90] sm:$0xf]
        %v710 = vld [vmem:[%s631 + $0x94] sm:$0x1]
        %v711 = vld [vmem:[%s631 + $0x98] sm:$0xf]
        %v712 = vld [vmem:[%s631 + $0x9c] sm:$0x1]
        %v713 = vld [vmem:[%s638] sm:$0xf]
        %v714 = vld [vmem:[%s638 + $0x4] sm:$0x1]
        %v715 = vld [vmem:[%s638 + $0x8] sm:$0xf]
        %v716 = vld [vmem:[%s638 + $0xc] sm:$0x1]
        %v717 = vld [vmem:[%s638 + $0x10] sm:$0xf]
        %v718 = vld [vmem:[%s638 + $0x14] sm:$0x1]
        %v719 = vld [vmem:[%s638 + $0x18] sm:$0xf]
        %v720 = vld [vmem:[%s638 + $0x1c] sm:$0x1]
        %v721 = vld [vmem:[%s638 + $0x20] sm:$0xf]
        %v722 = vld [vmem:[%s638 + $0x24] sm:$0x1]
        %v723 = vld [vmem:[%s638 + $0x28] sm:$0xf]
        %v724 = vld [vmem:[%s638 + $0x2c] sm:$0x1]
        %v725 = vld [vmem:[%s638 + $0x30] sm:$0xf]
        %v726 = vld [vmem:[%s638 + $0x34] sm:$0x1]
        %v727 = vld [vmem:[%s638 + $0x38] sm:$0xf]
        %v728 = vld [vmem:[%s638 + $0x3c] sm:$0x1]
        %v729 = vld [vmem:[%s638 + $0x40] sm:$0xf]
        %v730 = vld [vmem:[%s638 + $0x44] sm:$0x1]
        %v731 = vld [vmem:[%s638 + $0x48] sm:$0xf]
        %v732 = vld [vmem:[%s638 + $0x4c] sm:$0x1]
        %v733 = vld [vmem:[%s638 + $0x50] sm:$0xf]
        %v734 = vld [vmem:[%s638 + $0x54] sm:$0x1]
        %v735 = vld [vmem:[%s638 + $0x58] sm:$0xf]
        %v736 = vld [vmem:[%s638 + $0x5c] sm:$0x1]
        %v737 = vld [vmem:[%s638 + $0x60] sm:$0xf]
        %v738 = vld [vmem:[%s638 + $0x64] sm:$0x1]
        %v739 = vld [vmem:[%s638 + $0x68] sm:$0xf]
        %v740 = vld [vmem:[%s638 + $0x6c] sm:$0x1]
        %v741 = vld [vmem:[%s638 + $0x70] sm:$0xf]
        %v742 = vld [vmem:[%s638 + $0x74] sm:$0x1]
        %v743 = vld [vmem:[%s638 + $0x78] sm:$0xf]
        %v744 = vld [vmem:[%s638 + $0x7c] sm:$0x1]
        %v745 = vld [vmem:[%s638 + $0x80] sm:$0xf]
        %v746 = vld [vmem:[%s638 + $0x84] sm:$0x1]
        %v747 = vld [vmem:[%s638 + $0x88] sm:$0xf]
        %v748 = vld [vmem:[%s638 + $0x8c] sm:$0x1]
        %v749 = vld [vmem:[%s638 + $0x90] sm:$0xf]
        %v750 = vld [vmem:[%s638 + $0x94] sm:$0x1]
        %v751 = vld [vmem:[%s638 + $0x98] sm:$0xf]
        %v752 = vld [vmem:[%s638 + $0x9c] sm:$0x1]
        %v753 = vld [vmem:[%s2] sm:$0xf]
        %v754 = vld [vmem:[%s2 + $0x4] sm:$0xf]
        %v755 = vld [vmem:[%s2 + $0x8] sm:$0xf]
        %v756 = vld [vmem:[%s2 + $0xc] sm:$0xf]
        %v757 = vld [vmem:[%s2 + $0x10] sm:$0x7]
        %v774 = vunpack.c.l.b16 %v713
        %v775 = vunpack.c.l.b16 %v715
        %v776 = vunpack.c.l.b16 %v717
        %v777 = vunpack.c.l.b16 %v719
        %v778 = vunpack.c.l.b16 %v721
        %v779 = vunpack.c.l.b16 %v723
        %v780 = vunpack.c.l.b16 %v725
        %v781 = vunpack.c.l.b16 %v727
        %v782 = vunpack.c.l.b16 %v733
        %v783 = vunpack.c.l.b16 %v735
        %v784 = vunpack.c.l.b16 %v737
        %v785 = vunpack.c.l.b16 %v739
        %v786 = vunpack.c.l.b16 %v741
        %v787 = vunpack.c.l.b16 %v743
        %v788 = vunpack.c.l.b16 %v745
        %v789 = vunpack.c.l.b16 %v747
        %v790 = vpack.c.b16 %v774, %v774
        %v791 = vpack.c.b16 %v775, %v775
        %v792 = vpack.c.b16 %v776, %v776
        %v793 = vpack.c.b16 %v777, %v777
        %v794 = vpack.c.b16 %v778, %v778
        %v795 = vpack.c.b16 %v779, %v779
        %v796 = vpack.c.b16 %v780, %v780
        %v797 = vpack.c.b16 %v781, %v781
        %v798 = vpack.c.b16 %v782, %v782
        %v799 = vpack.c.b16 %v783, %v783
        %v800 = vpack.c.b16 %v784, %v784
        %v801 = vpack.c.b16 %v785, %v785
        %v802 = vpack.c.b16 %v786, %v786
        %v803 = vpack.c.b16 %v787, %v787
        %v804 = vpack.c.b16 %v788, %v788
        %v805 = vpack.c.b16 %v789, %v789
        %806 = vrot.lane.b32.xlu0 %v790, 4
        %v807 = vpop.permute.xlu0 %806
        %808 = vrot.lane.b32.xlu0 %v791, 4
        %v809 = vpop.permute.xlu0 %808
        %810 = vrot.lane.b32.xlu0 %v792, 4
        %v811 = vpop.permute.xlu0 %810
        %812 = vrot.lane.b32.xlu0 %v793, 4
        %v813 = vpop.permute.xlu0 %812
        %814 = vrot.lane.b32.xlu0 %v794, 4
        %v815 = vpop.permute.xlu0 %814
        %816 = vrot.lane.b32.xlu0 %v795, 4
        %v817 = vpop.permute.xlu0 %816
        %818 = vrot.lane.b32.xlu0 %v796, 4
        %v819 = vpop.permute.xlu0 %818
        %820 = vrot.lane.b32.xlu0 %v797, 4
        %v821 = vpop.permute.xlu0 %820
        %822 = vrot.lane.b32.xlu0 %v798, 4
        %v823 = vpop.permute.xlu0 %822
        %824 = vrot.lane.b32.xlu0 %v799, 4
        %v825 = vpop.permute.xlu0 %824
        %826 = vrot.lane.b32.xlu0 %v800, 4
        %v827 = vpop.permute.xlu0 %826
        %828 = vrot.lane.b32.xlu0 %v801, 4
        %v829 = vpop.permute.xlu0 %828
        %830 = vrot.lane.b32.xlu0 %v802, 4
        %v831 = vpop.permute.xlu0 %830
        %832 = vrot.lane.b32.xlu0 %v803, 4
        %v833 = vpop.permute.xlu0 %832
        %834 = vrot.lane.b32.xlu0 %v804, 4
        %v835 = vpop.permute.xlu0 %834
        %836 = vrot.lane.b32.xlu0 %v805, 4
        %v837 = vpop.permute.xlu0 %836
        %v870 = vunpack.c.l.b16 %v673
        %v871 = vunpack.c.l.b16 %v674
        %v872 = vunpack.c.l.b16 %v675
        %v873 = vunpack.c.l.b16 %v676
        %v874 = vunpack.c.l.b16 %v677
        %v875 = vunpack.c.l.b16 %v678
        %v876 = vunpack.c.l.b16 %v679
        %v877 = vunpack.c.l.b16 %v680
        %v878 = vunpack.c.l.b16 %v681
        %v879 = vunpack.c.l.b16 %v682
        %v880 = vunpack.c.l.b16 %v683
        %v881 = vunpack.c.l.b16 %v684
        %v882 = vunpack.c.l.b16 %v685
        %v883 = vunpack.c.l.b16 %v686
        %v884 = vunpack.c.l.b16 %v687
        %v885 = vunpack.c.l.b16 %v688
        %v886 = vunpack.c.l.b16 %v693
        %v887 = vunpack.c.l.b16 %v694
        %v888 = vunpack.c.l.b16 %v695
        %v889 = vunpack.c.l.b16 %v696
        %v890 = vunpack.c.l.b16 %v697
        %v891 = vunpack.c.l.b16 %v698
        %v892 = vunpack.c.l.b16 %v699
        %v893 = vunpack.c.l.b16 %v700
        %v894 = vunpack.c.l.b16 %v701
        %v895 = vunpack.c.l.b16 %v702
        %v896 = vunpack.c.l.b16 %v703
        %v897 = vunpack.c.l.b16 %v704
        %v898 = vunpack.c.l.b16 %v705
        %v899 = vunpack.c.l.b16 %v706
        %v900 = vunpack.c.l.b16 %v707
        %v901 = vunpack.c.l.b16 %v708
        %v902 = vpack.c.b16 %v871, %v870
        %v903 = vpack.c.b16 %v873, %v872
        %v904 = vpack.c.b16 %v875, %v874
        %v905 = vpack.c.b16 %v877, %v876
        %v906 = vpack.c.b16 %v879, %v878
        %v907 = vpack.c.b16 %v881, %v880
        %v908 = vpack.c.b16 %v883, %v882
        %v909 = vpack.c.b16 %v885, %v884
        %v910 = vpack.c.b16 %v887, %v886
        %v911 = vpack.c.b16 %v889, %v888
        %v912 = vpack.c.b16 %v891, %v890
        %v913 = vpack.c.b16 %v893, %v892
        %v914 = vpack.c.b16 %v895, %v894
        %v915 = vpack.c.b16 %v897, %v896
        %v916 = vpack.c.b16 %v899, %v898
        %v917 = vpack.c.b16 %v901, %v900
        %v919 = vshrl.u32 %v902, 16
        %v921 = vshll.u32 %v902, 16
        %v923 = vrot.slane %v921, 1
        %v924 = vor.u32 %v919, %v923
        %v926 = vshrl.u32 %v903, 16
        %v928 = vshll.u32 %v903, 16
        %v930 = vrot.slane %v928, 1
        %v931 = vor.u32 %v926, %v930
        %v933 = vshrl.u32 %v904, 16
        %v935 = vshll.u32 %v904, 16
        %v937 = vrot.slane %v935, 1
        %v938 = vor.u32 %v933, %v937
        %v940 = vshrl.u32 %v905, 16
        %v942 = vshll.u32 %v905, 16
        %v944 = vrot.slane %v942, 1
        %v945 = vor.u32 %v940, %v944
        %v947 = vshrl.u32 %v906, 16
        %v949 = vshll.u32 %v906, 16
        %v951 = vrot.slane %v949, 1
        %v952 = vor.u32 %v947, %v951
        %v954 = vshrl.u32 %v907, 16
        %v956 = vshll.u32 %v907, 16
        %v958 = vrot.slane %v956, 1
        %v959 = vor.u32 %v954, %v958
        %v961 = vshrl.u32 %v908, 16
        %v963 = vshll.u32 %v908, 16
        %v965 = vrot.slane %v963, 1
        %v966 = vor.u32 %v961, %v965
        %v968 = vshrl.u32 %v909, 16
        %v970 = vshll.u32 %v909, 16
        %v972 = vrot.slane %v970, 1
        %v973 = vor.u32 %v968, %v972
        %v975 = vshrl.u32 %v910, 16
        %v977 = vshll.u32 %v910, 16
        %v979 = vrot.slane %v977, 1
        %v980 = vor.u32 %v975, %v979
        %v982 = vshrl.u32 %v911, 16
        %v984 = vshll.u32 %v911, 16
        %v986 = vrot.slane %v984, 1
        %v987 = vor.u32 %v982, %v986
        %v989 = vshrl.u32 %v912, 16
        %v991 = vshll.u32 %v912, 16
        %v993 = vrot.slane %v991, 1
        %v994 = vor.u32 %v989, %v993
        %v996 = vshrl.u32 %v913, 16
        %v998 = vshll.u32 %v913, 16
        %v1000 = vrot.slane %v998, 1
        %v1001 = vor.u32 %v996, %v1000
        %v1003 = vshrl.u32 %v914, 16
        %v1005 = vshll.u32 %v914, 16
        %v1007 = vrot.slane %v1005, 1
        %v1008 = vor.u32 %v1003, %v1007
        %v1010 = vshrl.u32 %v915, 16
        %v1012 = vshll.u32 %v915, 16
        %v1014 = vrot.slane %v1012, 1
        %v1015 = vor.u32 %v1010, %v1014
        %v1017 = vshrl.u32 %v916, 16
        %v1019 = vshll.u32 %v916, 16
        %v1021 = vrot.slane %v1019, 1
        %v1022 = vor.u32 %v1017, %v1021
        %v1024 = vshrl.u32 %v917, 16
        %v1026 = vshll.u32 %v917, 16
        %v1028 = vrot.slane %v1026, 1
        %v1029 = vor.u32 %v1024, %v1028
        %1030 = vrot.lane.b32.xlu0 %v924, 8
        %v1031 = vpop.permute.xlu0 %1030
        %1032 = vrot.lane.b32.xlu0 %v931, 8
        %v1033 = vpop.permute.xlu0 %1032
        %1034 = vrot.lane.b32.xlu0 %v938, 8
        %v1035 = vpop.permute.xlu0 %1034
        %1036 = vrot.lane.b32.xlu0 %v945, 8
        %v1037 = vpop.permute.xlu0 %1036
        %1038 = vrot.lane.b32.xlu0 %v952, 8
        %v1039 = vpop.permute.xlu0 %1038
        %1040 = vrot.lane.b32.xlu0 %v959, 8
        %v1041 = vpop.permute.xlu0 %1040
        %1042 = vrot.lane.b32.xlu0 %v966, 8
        %v1043 = vpop.permute.xlu0 %1042
        %1044 = vrot.lane.b32.xlu0 %v973, 8
        %v1045 = vpop.permute.xlu0 %1044
        %1046 = vrot.lane.b32.xlu0 %v980, 8
        %v1047 = vpop.permute.xlu0 %1046
        %1048 = vrot.lane.b32.xlu0 %v987, 8
        %v1049 = vpop.permute.xlu0 %1048
        %1050 = vrot.lane.b32.xlu0 %v994, 8
        %v1051 = vpop.permute.xlu0 %1050
        %1052 = vrot.lane.b32.xlu0 %v1001, 8
        %v1053 = vpop.permute.xlu0 %1052
        %1054 = vrot.lane.b32.xlu0 %v1008, 8
        %v1055 = vpop.permute.xlu0 %1054
        %1056 = vrot.lane.b32.xlu0 %v1015, 8
        %v1057 = vpop.permute.xlu0 %1056
        %1058 = vrot.lane.b32.xlu0 %v1022, 8
        %v1059 = vpop.permute.xlu0 %1058
        %1060 = vrot.lane.b32.xlu0 %v1029, 8
        %v1061 = vpop.permute.xlu0 %1060
        %v1064 = vunpack.c.l.b16 %v689
        %v1065 = vunpack.c.l.b16 %v709
        %v1066 = vpack.c.b16 %v872, %v872
        %v1067 = vpack.c.b16 %v874, %v874
        %v1068 = vpack.c.b16 %v876, %v876
        %v1069 = vpack.c.b16 %v878, %v878
        %v1070 = vpack.c.b16 %v880, %v880
        %v1071 = vpack.c.b16 %v882, %v882
        %v1072 = vpack.c.b16 %v884, %v884
        %v1073 = vpack.c.b16 %v1064, %v1064
        %v1074 = vpack.c.b16 %v888, %v888
        %v1075 = vpack.c.b16 %v890, %v890
        %v1076 = vpack.c.b16 %v892, %v892
        %v1077 = vpack.c.b16 %v894, %v894
        %v1078 = vpack.c.b16 %v896, %v896
        %v1079 = vpack.c.b16 %v898, %v898
        %v1080 = vpack.c.b16 %v900, %v900
        %v1081 = vpack.c.b16 %v1065, %v1065
        %1082 = vrot.lane.b32.xlu0 %v1066, 12
        %v1083 = vpop.permute.xlu0 %1082
        %1084 = vrot.lane.b32.xlu0 %v1067, 12
        %v1085 = vpop.permute.xlu0 %1084
        %1086 = vrot.lane.b32.xlu0 %v1068, 12
        %v1087 = vpop.permute.xlu0 %1086
        %1088 = vrot.lane.b32.xlu0 %v1069, 12
        %v1089 = vpop.permute.xlu0 %1088
        %1090 = vrot.lane.b32.xlu0 %v1070, 12
        %v1091 = vpop.permute.xlu0 %1090
        %1092 = vrot.lane.b32.xlu0 %v1071, 12
        %v1093 = vpop.permute.xlu0 %1092
        %1094 = vrot.lane.b32.xlu0 %v1072, 12
        %v1095 = vpop.permute.xlu0 %1094
        %1096 = vrot.lane.b32.xlu0 %v1073, 12
        %v1097 = vpop.permute.xlu0 %1096
        %1098 = vrot.lane.b32.xlu0 %v1074, 12
        %v1099 = vpop.permute.xlu0 %1098
        %1100 = vrot.lane.b32.xlu0 %v1075, 12
        %v1101 = vpop.permute.xlu0 %1100
        %1102 = vrot.lane.b32.xlu0 %v1076, 12
        %v1103 = vpop.permute.xlu0 %1102
        %1104 = vrot.lane.b32.xlu0 %v1077, 12
        %v1105 = vpop.permute.xlu0 %1104
        %1106 = vrot.lane.b32.xlu0 %v1078, 12
        %v1107 = vpop.permute.xlu0 %1106
        %1108 = vrot.lane.b32.xlu0 %v1079, 12
        %v1109 = vpop.permute.xlu0 %1108
        %1110 = vrot.lane.b32.xlu0 %v1080, 12
        %v1111 = vpop.permute.xlu0 %1110
        %1112 = vrot.lane.b32.xlu0 %v1081, 12
        %v1113 = vpop.permute.xlu0 %1112
        %v1116 = vunpack.c.l.b16 %v729
        %v1117 = vunpack.c.l.b16 %v749
        %v1118 = vpack.c.b16 %v1116, %v1116
        %v1119 = vpack.c.b16 %v1117, %v1117
        %1120 = vrot.lane.b32.xlu0 %v791, 16
        %v1121 = vpop.permute.xlu0 %1120
        %1122 = vrot.lane.b32.xlu0 %v792, 16
        %v1123 = vpop.permute.xlu0 %1122
        %1124 = vrot.lane.b32.xlu0 %v793, 16
        %v1125 = vpop.permute.xlu0 %1124
        %1126 = vrot.lane.b32.xlu0 %v794, 16
        %v1127 = vpop.permute.xlu0 %1126
        %1128 = vrot.lane.b32.xlu0 %v795, 16
        %v1129 = vpop.permute.xlu0 %1128
        %1130 = vrot.lane.b32.xlu0 %v796, 16
        %v1131 = vpop.permute.xlu0 %1130
        %1132 = vrot.lane.b32.xlu0 %v797, 16
        %v1133 = vpop.permute.xlu0 %1132
        %1134 = vrot.lane.b32.xlu0 %v1118, 16
        %v1135 = vpop.permute.xlu0 %1134
        %1136 = vrot.lane.b32.xlu0 %v799, 16
        %v1137 = vpop.permute.xlu0 %1136
        %1138 = vrot.lane.b32.xlu0 %v800, 16
        %v1139 = vpop.permute.xlu0 %1138
        %1140 = vrot.lane.b32.xlu0 %v801, 16
        %v1141 = vpop.permute.xlu0 %1140
        %1142 = vrot.lane.b32.xlu0 %v802, 16
        %v1143 = vpop.permute.xlu0 %1142
        %1144 = vrot.lane.b32.xlu0 %v803, 16
        %v1145 = vpop.permute.xlu0 %1144
        %1146 = vrot.lane.b32.xlu0 %v804, 16
        %v1147 = vpop.permute.xlu0 %1146
        %1148 = vrot.lane.b32.xlu0 %v805, 16
        %v1149 = vpop.permute.xlu0 %1148
        %1150 = vrot.lane.b32.xlu0 %v1119, 16
        %v1151 = vpop.permute.xlu0 %1150
        %v1154 = vunpack.c.l.b16 %v690
        %v1155 = vunpack.c.l.b16 %v710
        %v1156 = vpack.c.b16 %v1154, %v1064
        %v1157 = vpack.c.b16 %v1155, %v1065
        %v1159 = vshrl.u32 %v1156, 16
        %v1161 = vshll.u32 %v1156, 16
        %v1163 = vrot.slane %v1161, 1
        %v1164 = vor.u32 %v1159, %v1163
        %v1166 = vshrl.u32 %v1157, 16
        %v1168 = vshll.u32 %v1157, 16
        %v1170 = vrot.slane %v1168, 1
        %v1171 = vor.u32 %v1166, %v1170
        %1172 = vrot.lane.b32.xlu0 %v931, 20
        %v1173 = vpop.permute.xlu0 %1172
        %1174 = vrot.lane.b32.xlu0 %v938, 20
        %v1175 = vpop.permute.xlu0 %1174
        %1176 = vrot.lane.b32.xlu0 %v945, 20
        %v1177 = vpop.permute.xlu0 %1176
        %1178 = vrot.lane.b32.xlu0 %v952, 20
        %v1179 = vpop.permute.xlu0 %1178
        %1180 = vrot.lane.b32.xlu0 %v959, 20
        %v1181 = vpop.permute.xlu0 %1180
        %1182 = vrot.lane.b32.xlu0 %v966, 20
        %v1183 = vpop.permute.xlu0 %1182
        %1184 = vrot.lane.b32.xlu0 %v973, 20
        %v1185 = vpop.permute.xlu0 %1184
        %1186 = vrot.lane.b32.xlu0 %v1164, 20
        %v1187 = vpop.permute.xlu0 %1186
        %1188 = vrot.lane.b32.xlu0 %v987, 20
        %v1189 = vpop.permute.xlu0 %1188
        %1190 = vrot.lane.b32.xlu0 %v994, 20
        %v1191 = vpop.permute.xlu0 %1190
        %1192 = vrot.lane.b32.xlu0 %v1001, 20
        %v1193 = vpop.permute.xlu0 %1192
        %1194 = vrot.lane.b32.xlu0 %v1008, 20
        %v1195 = vpop.permute.xlu0 %1194
        %1196 = vrot.lane.b32.xlu0 %v1015, 20
        %v1197 = vpop.permute.xlu0 %1196
        %1198 = vrot.lane.b32.xlu0 %v1022, 20
        %v1199 = vpop.permute.xlu0 %1198
        %1200 = vrot.lane.b32.xlu0 %v1029, 20
        %v1201 = vpop.permute.xlu0 %1200
        %1202 = vrot.lane.b32.xlu0 %v1171, 20
        %v1203 = vpop.permute.xlu0 %1202
        %v1206 = vunpack.c.l.b16 %v691
        %v1207 = vunpack.c.l.b16 %v711
        %v1208 = vpack.c.b16 %v1206, %v1206
        %v1209 = vpack.c.b16 %v1207, %v1207
        %1210 = vrot.lane.b32.xlu0 %v1067, 24
        %v1211 = vpop.permute.xlu0 %1210
        %1212 = vrot.lane.b32.xlu0 %v1068, 24
        %v1213 = vpop.permute.xlu0 %1212
        %1214 = vrot.lane.b32.xlu0 %v1069, 24
        %v1215 = vpop.permute.xlu0 %1214
        %1216 = vrot.lane.b32.xlu0 %v1070, 24
        %v1217 = vpop.permute.xlu0 %1216
        %1218 = vrot.lane.b32.xlu0 %v1071, 24
        %v1219 = vpop.permute.xlu0 %1218
        %1220 = vrot.lane.b32.xlu0 %v1072, 24
        %v1221 = vpop.permute.xlu0 %1220
        %1222 = vrot.lane.b32.xlu0 %v1073, 24
        %v1223 = vpop.permute.xlu0 %1222
        %1224 = vrot.lane.b32.xlu0 %v1208, 24
        %v1225 = vpop.permute.xlu0 %1224
        %1226 = vrot.lane.b32.xlu0 %v1075, 24
        %v1227 = vpop.permute.xlu0 %1226
        %1228 = vrot.lane.b32.xlu0 %v1076, 24
        %v1229 = vpop.permute.xlu0 %1228
        %1230 = vrot.lane.b32.xlu0 %v1077, 24
        %v1231 = vpop.permute.xlu0 %1230
        %1232 = vrot.lane.b32.xlu0 %v1078, 24
        %v1233 = vpop.permute.xlu0 %1232
        %1234 = vrot.lane.b32.xlu0 %v1079, 24
        %v1235 = vpop.permute.xlu0 %1234
        %1236 = vrot.lane.b32.xlu0 %v1080, 24
        %v1237 = vpop.permute.xlu0 %1236
        %1238 = vrot.lane.b32.xlu0 %v1081, 24
        %v1239 = vpop.permute.xlu0 %1238
        %1240 = vrot.lane.b32.xlu0 %v1209, 24
        %v1241 = vpop.permute.xlu0 %1240
        %v1244 = vunpack.c.l.b16 %v731
        %v1245 = vunpack.c.l.b16 %v751
        %v1246 = vpack.c.b16 %v1244, %v1244
        %v1247 = vpack.c.b16 %v1245, %v1245
        %1248 = vrot.lane.b32.xlu0 %v792, 28
        %v1249 = vpop.permute.xlu0 %1248
        %1250 = vrot.lane.b32.xlu0 %v793, 28
        %v1251 = vpop.permute.xlu0 %1250
        %1252 = vrot.lane.b32.xlu0 %v794, 28
        %v1253 = vpop.permute.xlu0 %1252
        %1254 = vrot.lane.b32.xlu0 %v795, 28
        %v1255 = vpop.permute.xlu0 %1254
        %1256 = vrot.lane.b32.xlu0 %v796, 28
        %v1257 = vpop.permute.xlu0 %1256
        %1258 = vrot.lane.b32.xlu0 %v797, 28
        %v1259 = vpop.permute.xlu0 %1258
        %1260 = vrot.lane.b32.xlu0 %v1118, 28
        %v1261 = vpop.permute.xlu0 %1260
        %1262 = vrot.lane.b32.xlu0 %v1246, 28
        %v1263 = vpop.permute.xlu0 %1262
        %1264 = vrot.lane.b32.xlu0 %v800, 28
        %v1265 = vpop.permute.xlu0 %1264
        %1266 = vrot.lane.b32.xlu0 %v801, 28
        %v1267 = vpop.permute.xlu0 %1266
        %1268 = vrot.lane.b32.xlu0 %v802, 28
        %v1269 = vpop.permute.xlu0 %1268
        %1270 = vrot.lane.b32.xlu0 %v803, 28
        %v1271 = vpop.permute.xlu0 %1270
        %1272 = vrot.lane.b32.xlu0 %v804, 28
        %v1273 = vpop.permute.xlu0 %1272
        %1274 = vrot.lane.b32.xlu0 %v805, 28
        %v1275 = vpop.permute.xlu0 %1274
        %1276 = vrot.lane.b32.xlu0 %v1119, 28
        %v1277 = vpop.permute.xlu0 %1276
        %1278 = vrot.lane.b32.xlu0 %v1247, 28
        %v1279 = vpop.permute.xlu0 %1278
        %v1282 = vunpack.c.l.b16 %v692
        %v1283 = vunpack.c.l.b16 %v712
        %v1284 = vpack.c.b16 %v1282, %v1206
        %v1285 = vpack.c.b16 %v1283, %v1207
        %v1287 = vshrl.u32 %v1284, 16
        %v1289 = vshll.u32 %v1284, 16
        %v1291 = vrot.slane %v1289, 1
        %v1292 = vor.u32 %v1287, %v1291
        %v1294 = vshrl.u32 %v1285, 16
        %v1296 = vshll.u32 %v1285, 16
        %v1298 = vrot.slane %v1296, 1
        %v1299 = vor.u32 %v1294, %v1298
        %1300 = vrot.lane.b32.xlu0 %v938, 32
        %v1301 = vpop.permute.xlu0 %1300
        %1302 = vrot.lane.b32.xlu0 %v945, 32
        %v1303 = vpop.permute.xlu0 %1302
        %1304 = vrot.lane.b32.xlu0 %v952, 32
        %v1305 = vpop.permute.xlu0 %1304
        %1306 = vrot.lane.b32.xlu0 %v959, 32
        %v1307 = vpop.permute.xlu0 %1306
        %1308 = vrot.lane.b32.xlu0 %v966, 32
        %v1309 = vpop.permute.xlu0 %1308
        %1310 = vrot.lane.b32.xlu0 %v973, 32
        %v1311 = vpop.permute.xlu0 %1310
        %1312 = vrot.lane.b32.xlu0 %v1164, 32
        %v1313 = vpop.permute.xlu0 %1312
        %1314 = vrot.lane.b32.xlu0 %v1292, 32
        %v1315 = vpop.permute.xlu0 %1314
        %1316 = vrot.lane.b32.xlu0 %v994, 32
        %v1317 = vpop.permute.xlu0 %1316
        %1318 = vrot.lane.b32.xlu0 %v1001, 32
        %v1319 = vpop.permute.xlu0 %1318
        %1320 = vrot.lane.b32.xlu0 %v1008, 32
        %v1321 = vpop.permute.xlu0 %1320
        %1322 = vrot.lane.b32.xlu0 %v1015, 32
        %v1323 = vpop.permute.xlu0 %1322
        %1324 = vrot.lane.b32.xlu0 %v1022, 32
        %v1325 = vpop.permute.xlu0 %1324
        %1326 = vrot.lane.b32.xlu0 %v1029, 32
        %v1327 = vpop.permute.xlu0 %1326
        %1328 = vrot.lane.b32.xlu0 %v1171, 32
        %v1329 = vpop.permute.xlu0 %1328
        %1330 = vrot.lane.b32.xlu0 %v1299, 32
        %v1331 = vpop.permute.xlu0 %1330
        %vm1332 = vcmask 31744
        %v1335 = vsel %vm1332, %v673, %v807
        %v1338 = vsel %vm1332, %v675, %v809
        %v1341 = vsel %vm1332, %v677, %v811
        %v1344 = vsel %vm1332, %v679, %v813
        %v1347 = vsel %vm1332, %v681, %v815
        %v1350 = vsel %vm1332, %v683, %v817
        %v1353 = vsel %vm1332, %v685, %v819
        %v1356 = vsel %vm1332, %v687, %v821
        %v1359 = vsel %vm1332, %v693, %v823
        %v1362 = vsel %vm1332, %v695, %v825
        %v1365 = vsel %vm1332, %v697, %v827
        %v1368 = vsel %vm1332, %v699, %v829
        %v1371 = vsel %vm1332, %v701, %v831
        %v1374 = vsel %vm1332, %v703, %v833
        %v1377 = vsel %vm1332, %v705, %v835
        %v1380 = vsel %vm1332, %v707, %v837
        %vm1381 = vcmask 64512
        %v1383 = vsel %vm1381, %v1335, %v1031
        %v1385 = vsel %vm1381, %v1338, %v1033
        %v1387 = vsel %vm1381, %v1341, %v1035
        %v1389 = vsel %vm1381, %v1344, %v1037
        %v1391 = vsel %vm1381, %v1347, %v1039
        %v1393 = vsel %vm1381, %v1350, %v1041
        %v1395 = vsel %vm1381, %v1353, %v1043
        %v1397 = vsel %vm1381, %v1356, %v1045
        %v1399 = vsel %vm1381, %v1359, %v1047
        %v1401 = vsel %vm1381, %v1362, %v1049
        %v1403 = vsel %vm1381, %v1365, %v1051
        %v1405 = vsel %vm1381, %v1368, %v1053
        %v1407 = vsel %vm1381, %v1371, %v1055
        %v1409 = vsel %vm1381, %v1374, %v1057
        %v1411 = vsel %vm1381, %v1377, %v1059
        %v1413 = vsel %vm1381, %v1380, %v1061
        %vm1414 = vcmask 97280
        %v1416 = vsel %vm1414, %v1383, %v1083
        %v1418 = vsel %vm1414, %v1385, %v1085
        %v1420 = vsel %vm1414, %v1387, %v1087
        %v1422 = vsel %vm1414, %v1389, %v1089
        %v1424 = vsel %vm1414, %v1391, %v1091
        %v1426 = vsel %vm1414, %v1393, %v1093
        %v1428 = vsel %vm1414, %v1395, %v1095
        %v1430 = vsel %vm1414, %v1397, %v1097
        %v1432 = vsel %vm1414, %v1399, %v1099
        %v1434 = vsel %vm1414, %v1401, %v1101
        %v1436 = vsel %vm1414, %v1403, %v1103
        %v1438 = vsel %vm1414, %v1405, %v1105
        %v1440 = vsel %vm1414, %v1407, %v1107
        %v1442 = vsel %vm1414, %v1409, %v1109
        %v1444 = vsel %vm1414, %v1411, %v1111
        %v1446 = vsel %vm1414, %v1413, %v1113
        %vm1447 = vcmask 130048
        %v1449 = vsel %vm1447, %v1416, %v1121
        %v1451 = vsel %vm1447, %v1418, %v1123
        %v1453 = vsel %vm1447, %v1420, %v1125
        %v1455 = vsel %vm1447, %v1422, %v1127
        %v1457 = vsel %vm1447, %v1424, %v1129
        %v1459 = vsel %vm1447, %v1426, %v1131
        %v1461 = vsel %vm1447, %v1428, %v1133
        %v1463 = vsel %vm1447, %v1430, %v1135
        %v1465 = vsel %vm1447, %v1432, %v1137
        %v1467 = vsel %vm1447, %v1434, %v1139
        %v1469 = vsel %vm1447, %v1436, %v1141
        %v1471 = vsel %vm1447, %v1438, %v1143
        %v1473 = vsel %vm1447, %v1440, %v1145
        %v1475 = vsel %vm1447, %v1442, %v1147
        %v1477 = vsel %vm1447, %v1444, %v1149
        %v1479 = vsel %vm1447, %v1446, %v1151
        %vm1480 = vcmask 162816
        %v1482 = vsel %vm1480, %v1449, %v1173
        %v1484 = vsel %vm1480, %v1451, %v1175
        %v1486 = vsel %vm1480, %v1453, %v1177
        %v1488 = vsel %vm1480, %v1455, %v1179
        %v1490 = vsel %vm1480, %v1457, %v1181
        %v1492 = vsel %vm1480, %v1459, %v1183
        %v1494 = vsel %vm1480, %v1461, %v1185
        %v1496 = vsel %vm1480, %v1463, %v1187
        %v1498 = vsel %vm1480, %v1465, %v1189
        %v1500 = vsel %vm1480, %v1467, %v1191
        %v1502 = vsel %vm1480, %v1469, %v1193
        %v1504 = vsel %vm1480, %v1471, %v1195
        %v1506 = vsel %vm1480, %v1473, %v1197
        %v1508 = vsel %vm1480, %v1475, %v1199
        %v1510 = vsel %vm1480, %v1477, %v1201
        %v1512 = vsel %vm1480, %v1479, %v1203
        %vm1513 = vcmask 195584
        %v1515 = vsel %vm1513, %v1482, %v1211
        %v1517 = vsel %vm1513, %v1484, %v1213
        %v1519 = vsel %vm1513, %v1486, %v1215
        %v1521 = vsel %vm1513, %v1488, %v1217
        %v1523 = vsel %vm1513, %v1490, %v1219
        %v1525 = vsel %vm1513, %v1492, %v1221
        %v1527 = vsel %vm1513, %v1494, %v1223
        %v1529 = vsel %vm1513, %v1496, %v1225
        %v1531 = vsel %vm1513, %v1498, %v1227
        %v1533 = vsel %vm1513, %v1500, %v1229
        %v1535 = vsel %vm1513, %v1502, %v1231
        %v1537 = vsel %vm1513, %v1504, %v1233
        %v1539 = vsel %vm1513, %v1506, %v1235
        %v1541 = vsel %vm1513, %v1508, %v1237
        %v1543 = vsel %vm1513, %v1510, %v1239
        %v1545 = vsel %vm1513, %v1512, %v1241
        %vm1546 = vcmask 228352
        %v1548 = vsel %vm1546, %v1515, %v1249
        %v1550 = vsel %vm1546, %v1517, %v1251
        %v1552 = vsel %vm1546, %v1519, %v1253
        %v1554 = vsel %vm1546, %v1521, %v1255
        %v1556 = vsel %vm1546, %v1523, %v1257
        %v1558 = vsel %vm1546, %v1525, %v1259
        %v1560 = vsel %vm1546, %v1527, %v1261
        %v1562 = vsel %vm1546, %v1529, %v1263
        %v1564 = vsel %vm1546, %v1531, %v1265
        %v1566 = vsel %vm1546, %v1533, %v1267
        %v1568 = vsel %vm1546, %v1535, %v1269
        %v1570 = vsel %vm1546, %v1537, %v1271
        %v1572 = vsel %vm1546, %v1539, %v1273
        %v1574 = vsel %vm1546, %v1541, %v1275
        %v1576 = vsel %vm1546, %v1543, %v1277
        %v1578 = vsel %vm1546, %v1545, %v1279
        %vm1579 = vcmask 261120
        %v1581 = vsel %vm1579, %v1548, %v1301
        %v1583 = vsel %vm1579, %v1550, %v1303
        %v1585 = vsel %vm1579, %v1552, %v1305
        %v1587 = vsel %vm1579, %v1554, %v1307
        %v1589 = vsel %vm1579, %v1556, %v1309
        %v1591 = vsel %vm1579, %v1558, %v1311
        %v1593 = vsel %vm1579, %v1560, %v1313
        %v1595 = vsel %vm1579, %v1562, %v1315
        %v1597 = vsel %vm1579, %v1564, %v1317
        %v1599 = vsel %vm1579, %v1566, %v1319
        %v1601 = vsel %vm1579, %v1568, %v1321
        %v1603 = vsel %vm1579, %v1570, %v1323
        %v1605 = vsel %vm1579, %v1572, %v1325
        %v1607 = vsel %vm1579, %v1574, %v1327
        %v1609 = vsel %vm1579, %v1576, %v1329
        %v1611 = vsel %vm1579, %v1578, %v1331
        %vm1612 = vcmask 293888
        %v1614 = vsel %vm1612, %v1581, 1065369472
        %v1615 = vsel %vm1612, %v1583, 1065369472
        %v1616 = vsel %vm1612, %v1585, 1065369472
        %v1617 = vsel %vm1612, %v1587, 1065369472
        %v1618 = vsel %vm1612, %v1589, 1065369472
        %v1619 = vsel %vm1612, %v1591, 1065369472
        %v1620 = vsel %vm1612, %v1593, 1065369472
        %v1621 = vsel %vm1612, %v1595, 1065369472
        %v1622 = vsel %vm1612, %v1597, 1065369472
        %v1623 = vsel %vm1612, %v1599, 1065369472
        %v1624 = vsel %vm1612, %v1601, 1065369472
        %v1625 = vsel %vm1612, %v1603, 1065369472
        %v1626 = vsel %vm1612, %v1605, 1065369472
        %v1627 = vsel %vm1612, %v1607, 1065369472
        %v1628 = vsel %vm1612, %v1609, 1065369472
        %v1629 = vsel %vm1612, %v1611, 1065369472
        %v1646 = vunpack.c.l.b16 %v1614
        %v1647 = vunpack.c.l.b16 %v1615
        %v1648 = vunpack.c.l.b16 %v1616
        %v1649 = vunpack.c.l.b16 %v1617
        %v1650 = vunpack.c.l.b16 %v1618
        %v1651 = vunpack.c.l.b16 %v1619
        %v1652 = vunpack.c.l.b16 %v1620
        %v1653 = vunpack.c.l.b16 %v1621
        %v1654 = vunpack.c.l.b16 %v1622
        %v1655 = vunpack.c.l.b16 %v1623
        %v1656 = vunpack.c.l.b16 %v1624
        %v1657 = vunpack.c.l.b16 %v1625
        %v1658 = vunpack.c.l.b16 %v1626
        %v1659 = vunpack.c.l.b16 %v1627
        %v1660 = vunpack.c.l.b16 %v1628
        %v1661 = vunpack.c.l.b16 %v1629
        %v1662 = vpack.c.b16 %v1647, %v1646
        %v1663 = vpack.c.b16 %v1649, %v1648
        %v1664 = vpack.c.b16 %v1651, %v1650
        %v1665 = vpack.c.b16 %v1653, %v1652
        %v1666 = vpack.c.b16 %v1655, %v1654
        %v1667 = vpack.c.b16 %v1657, %v1656
        %v1668 = vpack.c.b16 %v1659, %v1658
        %v1669 = vpack.c.b16 %v1661, %v1660
        %v1675 = vunpack.c.l.b16 %v753
        %v1676 = vunpack.c.l.b16 %v754
        %v1677 = vunpack.c.l.b16 %v755
        %v1678 = vunpack.c.l.b16 %v756
        %v1679 = vunpack.c.l.b16 %v757
        %v1680 = vpack.c.b16 %v1676, %v1675
        %v1681 = vpack.c.b16 %v1678, %v1677
        %v1682 = vpack.c.b16 %v1679, %v1679
        %vm1685 = vcmask 302080
        %v1687 = vsel %vm1685, %v1662, 0
        %v1690 = vsel %vm1685, %v1663, 0
        %v1693 = vsel %vm1685, %v1664, 0
        %v1696 = vsel %vm1685, %v1665, 0
        %v1699 = vsel %vm1685, %v1666, 0
        %v1702 = vsel %vm1685, %v1667, 0
        %v1705 = vsel %vm1685, %v1668, 0
        %v1708 = vsel %vm1685, %v1669, 0
        %vm1710 = vcmask 1041408
        %vm1711 = vcmask 1042432
        %v1712 = vsel %vm1710, 4294967295, 65535
        %v1713 = vsel %vm1711, %v1712, 0
        %v1715 = vand.u32 %v1682, %v1713
        %1717 = vmatprep.subr.bf16.mxu0 0
        %1718 = vmatpush1.bf16.msra.mxu0 0
        %1719 = vmatprep.subr.bf16.mxu0 0
        %1720 = vmatpush1.bf16.msra.mxu0 0
        %1721 = vmatprep.subr.bf16.mxu0 0
        %1722 = vmatpush1.bf16.msra.mxu0 0
        %1723 = vmatprep.subr.bf16.mxu0 0
        %1724 = vmatpush1.bf16.msra.mxu0 0
        %1725 = vmatprep.subr.bf16.mxu0 0
        %1726 = vmatpush1.bf16.msra.mxu0 0
        %1727 = vmatprep.subr.bf16.mxu0 0
        %1728 = vmatpush1.bf16.msra.mxu0 %v1715
        %1729 = vmatprep.subr.bf16.mxu0 0
        %1730 = vmatpush1.bf16.msra.mxu0 %v1681
        %1731 = vmatprep.subr.bf16.mxu0 0
        %1732 = vmatpush1.bf16.msra.mxu0 %v1680
        %1733 = vmatprep.subr.bf16.mxu0 0
        %1734 = vmatpush2.bf16.msra.mxu0 0
        %1735 = vmatprep.subr.bf16.mxu0 0
        %1736 = vmatpush2.bf16.msra.mxu0 0
        %1737 = vmatprep.subr.bf16.mxu0 0
        %1738 = vmatpush2.bf16.msra.mxu0 0
        %1739 = vmatprep.subr.bf16.mxu0 0
        %1740 = vmatpush2.bf16.msra.mxu0 0
        %1741 = vmatprep.subr.bf16.mxu0 0
        %1742 = vmatpush2.bf16.msra.mxu0 0
        %1743 = vmatprep.subr.bf16.mxu0 0
        %1744 = vmatpush2.bf16.msra.mxu0 0
        %1745 = vmatprep.subr.bf16.mxu0 0
        %1746 = vmatpush2.bf16.msra.mxu0 0
        %1747 = vmatprep.subr.bf16.mxu0 0
        %1748 = vmatpush2.bf16.msra.mxu0 0
        %1749 = vmatprep.mubr.bf16.mxu0 0
        %1750 = vmatmul.mubr.bf16.gmra.mxu0 %v1687
        %v1751 = vpop.f32.mrf.mxu0
        %v1752 = vadd.f32 0.0, %v1751
        %v1753 = vpop.f32.mrf.mxu0
        %v1754 = vpop.f32.mrf.mxu0
        %v1755 = vadd.f32 0.0, %v1754
        %v1756 = vpop.f32.mrf.mxu0
        %1757 = vmatprep.mubr.bf16.mxu0 0
        %1758 = vmatmul.mubr.bf16.gmra.mxu0 %v1690
        %v1759 = vpop.f32.mrf.mxu0
        %v1760 = vadd.f32 0.0, %v1759
        %v1761 = vpop.f32.mrf.mxu0
        %v1762 = vpop.f32.mrf.mxu0
        %v1763 = vadd.f32 0.0, %v1762
        %v1764 = vpop.f32.mrf.mxu0
        %1765 = vmatprep.mubr.bf16.mxu0 0
        %1766 = vmatmul.mubr.bf16.gmra.mxu0 %v1693
        %v1767 = vpop.f32.mrf.mxu0
        %v1768 = vadd.f32 0.0, %v1767
        %v1769 = vpop.f32.mrf.mxu0
        %v1770 = vpop.f32.mrf.mxu0
        %v1771 = vadd.f32 0.0, %v1770
        %v1772 = vpop.f32.mrf.mxu0
        %1773 = vmatprep.mubr.bf16.mxu0 0
        %1774 = vmatmul.mubr.bf16.gmra.mxu0 %v1696
        %v1775 = vpop.f32.mrf.mxu0
        %v1776 = vadd.f32 0.0, %v1775
        %v1777 = vpop.f32.mrf.mxu0
        %v1778 = vpop.f32.mrf.mxu0
        %v1779 = vadd.f32 0.0, %v1778
        %v1780 = vpop.f32.mrf.mxu0
        %1781 = vmatprep.mubr.bf16.mxu0 0
        %1782 = vmatmul.mubr.bf16.gmra.mxu0 %v1699
        %v1783 = vpop.f32.mrf.mxu0
        %v1784 = vadd.f32 0.0, %v1783
        %v1785 = vpop.f32.mrf.mxu0
        %v1786 = vpop.f32.mrf.mxu0
        %v1787 = vadd.f32 0.0, %v1786
        %v1788 = vpop.f32.mrf.mxu0
        %1789 = vmatprep.mubr.bf16.mxu0 0
        %1790 = vmatmul.mubr.bf16.gmra.mxu0 %v1702
        %v1791 = vpop.f32.mrf.mxu0
        %v1792 = vadd.f32 0.0, %v1791
        %v1793 = vpop.f32.mrf.mxu0
        %v1794 = vpop.f32.mrf.mxu0
        %v1795 = vadd.f32 0.0, %v1794
        %v1796 = vpop.f32.mrf.mxu0
        %1797 = vmatprep.mubr.bf16.mxu0 0
        %1798 = vmatmul.mubr.bf16.gmra.mxu0 %v1705
        %v1799 = vpop.f32.mrf.mxu0
        %v1800 = vadd.f32 0.0, %v1799
        %v1801 = vpop.f32.mrf.mxu0
        %v1802 = vpop.f32.mrf.mxu0
        %v1803 = vadd.f32 0.0, %v1802
        %v1804 = vpop.f32.mrf.mxu0
        %1805 = vmatprep.mubr.bf16.mxu0 0
        %1806 = vmatmul.mubr.bf16.gmra.mxu0 %v1708
        %v1807 = vpop.f32.mrf.mxu0
        %v1808 = vadd.f32 0.0, %v1807
        %v1809 = vpop.f32.mrf.mxu0
        %v1810 = vpop.f32.mrf.mxu0
        %v1811 = vadd.f32 0.0, %v1810
        %v1812 = vpop.f32.mrf.mxu0
        %1813 = vdwg.mxu0
        %1814 = vrot.lane.b32.xlu0 %v924, 4
        %v1815 = vpop.permute.xlu0 %1814
        %1816 = vrot.lane.b32.xlu0 %v931, 4
        %v1817 = vpop.permute.xlu0 %1816
        %1818 = vrot.lane.b32.xlu0 %v938, 4
        %v1819 = vpop.permute.xlu0 %1818
        %1820 = vrot.lane.b32.xlu0 %v945, 4
        %v1821 = vpop.permute.xlu0 %1820
        %1822 = vrot.lane.b32.xlu0 %v952, 4
        %v1823 = vpop.permute.xlu0 %1822
        %1824 = vrot.lane.b32.xlu0 %v959, 4
        %v1825 = vpop.permute.xlu0 %1824
        %1826 = vrot.lane.b32.xlu0 %v966, 4
        %v1827 = vpop.permute.xlu0 %1826
        %1828 = vrot.lane.b32.xlu0 %v973, 4
        %v1829 = vpop.permute.xlu0 %1828
        %1830 = vrot.lane.b32.xlu0 %v980, 4
        %v1831 = vpop.permute.xlu0 %1830
        %1832 = vrot.lane.b32.xlu0 %v987, 4
        %v1833 = vpop.permute.xlu0 %1832
        %1834 = vrot.lane.b32.xlu0 %v994, 4
        %v1835 = vpop.permute.xlu0 %1834
        %1836 = vrot.lane.b32.xlu0 %v1001, 4
        %v1837 = vpop.permute.xlu0 %1836
        %1838 = vrot.lane.b32.xlu0 %v1008, 4
        %v1839 = vpop.permute.xlu0 %1838
        %1840 = vrot.lane.b32.xlu0 %v1015, 4
        %v1841 = vpop.permute.xlu0 %1840
        %1842 = vrot.lane.b32.xlu0 %v1022, 4
        %v1843 = vpop.permute.xlu0 %1842
        %1844 = vrot.lane.b32.xlu0 %v1029, 4
        %v1845 = vpop.permute.xlu0 %1844
        %v1862 = vunpack.c.l.b16 %v714
        %v1863 = vunpack.c.l.b16 %v716
        %v1864 = vunpack.c.l.b16 %v718
        %v1865 = vunpack.c.l.b16 %v720
        %v1866 = vunpack.c.l.b16 %v722
        %v1867 = vunpack.c.l.b16 %v724
        %v1868 = vunpack.c.l.b16 %v726
        %v1869 = vunpack.c.l.b16 %v728
        %v1870 = vunpack.c.l.b16 %v734
        %v1871 = vunpack.c.l.b16 %v736
        %v1872 = vunpack.c.l.b16 %v738
        %v1873 = vunpack.c.l.b16 %v740
        %v1874 = vunpack.c.l.b16 %v742
        %v1875 = vunpack.c.l.b16 %v744
        %v1876 = vunpack.c.l.b16 %v746
        %v1877 = vunpack.c.l.b16 %v748
        %v1878 = vpack.c.b16 %v1862, %v774
        %v1879 = vpack.c.b16 %v1863, %v775
        %v1880 = vpack.c.b16 %v1864, %v776
        %v1881 = vpack.c.b16 %v1865, %v777
        %v1882 = vpack.c.b16 %v1866, %v778
        %v1883 = vpack.c.b16 %v1867, %v779
        %v1884 = vpack.c.b16 %v1868, %v780
        %v1885 = vpack.c.b16 %v1869, %v781
        %v1886 = vpack.c.b16 %v1870, %v782
        %v1887 = vpack.c.b16 %v1871, %v783
        %v1888 = vpack.c.b16 %v1872, %v784
        %v1889 = vpack.c.b16 %v1873, %v785
        %v1890 = vpack.c.b16 %v1874, %v786
        %v1891 = vpack.c.b16 %v1875, %v787
        %v1892 = vpack.c.b16 %v1876, %v788
        %v1893 = vpack.c.b16 %v1877, %v789
        %v1895 = vshrl.u32 %v1878, 16
        %v1897 = vshll.u32 %v1878, 16
        %v1899 = vrot.slane %v1897, 1
        %v1900 = vor.u32 %v1895, %v1899
        %v1902 = vshrl.u32 %v1879, 16
        %v1904 = vshll.u32 %v1879, 16
        %v1906 = vrot.slane %v1904, 1
        %v1907 = vor.u32 %v1902, %v1906
        %v1909 = vshrl.u32 %v1880, 16
        %v1911 = vshll.u32 %v1880, 16
        %v1913 = vrot.slane %v1911, 1
        %v1914 = vor.u32 %v1909, %v1913
        %v1916 = vshrl.u32 %v1881, 16
        %v1918 = vshll.u32 %v1881, 16
        %v1920 = vrot.slane %v1918, 1
        %v1921 = vor.u32 %v1916, %v1920
        %v1923 = vshrl.u32 %v1882, 16
        %v1925 = vshll.u32 %v1882, 16
        %v1927 = vrot.slane %v1925, 1
        %v1928 = vor.u32 %v1923, %v1927
        %v1930 = vshrl.u32 %v1883, 16
        %v1932 = vshll.u32 %v1883, 16
        %v1934 = vrot.slane %v1932, 1
        %v1935 = vor.u32 %v1930, %v1934
        %v1937 = vshrl.u32 %v1884, 16
        %v1939 = vshll.u32 %v1884, 16
        %v1941 = vrot.slane %v1939, 1
        %v1942 = vor.u32 %v1937, %v1941
        %v1944 = vshrl.u32 %v1885, 16
        %v1946 = vshll.u32 %v1885, 16
        %v1948 = vrot.slane %v1946, 1
        %v1949 = vor.u32 %v1944, %v1948
        %v1951 = vshrl.u32 %v1886, 16
        %v1953 = vshll.u32 %v1886, 16
        %v1955 = vrot.slane %v1953, 1
        %v1956 = vor.u32 %v1951, %v1955
        %v1958 = vshrl.u32 %v1887, 16
        %v1960 = vshll.u32 %v1887, 16
        %v1962 = vrot.slane %v1960, 1
        %v1963 = vor.u32 %v1958, %v1962
        %v1965 = vshrl.u32 %v1888, 16
        %v1967 = vshll.u32 %v1888, 16
        %v1969 = vrot.slane %v1967, 1
        %v1970 = vor.u32 %v1965, %v1969
        %v1972 = vshrl.u32 %v1889, 16
        %v1974 = vshll.u32 %v1889, 16
        %v1976 = vrot.slane %v1974, 1
        %v1977 = vor.u32 %v1972, %v1976
        %v1979 = vshrl.u32 %v1890, 16
        %v1981 = vshll.u32 %v1890, 16
        %v1983 = vrot.slane %v1981, 1
        %v1984 = vor.u32 %v1979, %v1983
        %v1986 = vshrl.u32 %v1891, 16
        %v1988 = vshll.u32 %v1891, 16
        %v1990 = vrot.slane %v1988, 1
        %v1991 = vor.u32 %v1986, %v1990
        %v1993 = vshrl.u32 %v1892, 16
        %v1995 = vshll.u32 %v1892, 16
        %v1997 = vrot.slane %v1995, 1
        %v1998 = vor.u32 %v1993, %v1997
        %v2000 = vshrl.u32 %v1893, 16
        %v2002 = vshll.u32 %v1893, 16
        %v2004 = vrot.slane %v2002, 1
        %v2005 = vor.u32 %v2000, %v2004
        %2006 = vrot.lane.b32.xlu0 %v1900, 8
        %v2007 = vpop.permute.xlu0 %2006
        %2008 = vrot.lane.b32.xlu0 %v1907, 8
        %v2009 = vpop.permute.xlu0 %2008
        %2010 = vrot.lane.b32.xlu0 %v1914, 8
        %v2011 = vpop.permute.xlu0 %2010
        %2012 = vrot.lane.b32.xlu0 %v1921, 8
        %v2013 = vpop.permute.xlu0 %2012
        %2014 = vrot.lane.b32.xlu0 %v1928, 8
        %v2015 = vpop.permute.xlu0 %2014
        %2016 = vrot.lane.b32.xlu0 %v1935, 8
        %v2017 = vpop.permute.xlu0 %2016
        %2018 = vrot.lane.b32.xlu0 %v1942, 8
        %v2019 = vpop.permute.xlu0 %2018
        %2020 = vrot.lane.b32.xlu0 %v1949, 8
        %v2021 = vpop.permute.xlu0 %2020
        %2022 = vrot.lane.b32.xlu0 %v1956, 8
        %v2023 = vpop.permute.xlu0 %2022
        %2024 = vrot.lane.b32.xlu0 %v1963, 8
        %v2025 = vpop.permute.xlu0 %2024
        %2026 = vrot.lane.b32.xlu0 %v1970, 8
        %v2027 = vpop.permute.xlu0 %2026
        %2028 = vrot.lane.b32.xlu0 %v1977, 8
        %v2029 = vpop.permute.xlu0 %2028
        %2030 = vrot.lane.b32.xlu0 %v1984, 8
        %v2031 = vpop.permute.xlu0 %2030
        %2032 = vrot.lane.b32.xlu0 %v1991, 8
        %v2033 = vpop.permute.xlu0 %2032
        %2034 = vrot.lane.b32.xlu0 %v1998, 8
        %v2035 = vpop.permute.xlu0 %2034
        %2036 = vrot.lane.b32.xlu0 %v2005, 8
        %v2037 = vpop.permute.xlu0 %2036
        %2038 = vrot.lane.b32.xlu0 %v791, 12
        %v2039 = vpop.permute.xlu0 %2038
        %2040 = vrot.lane.b32.xlu0 %v792, 12
        %v2041 = vpop.permute.xlu0 %2040
        %2042 = vrot.lane.b32.xlu0 %v793, 12
        %v2043 = vpop.permute.xlu0 %2042
        %2044 = vrot.lane.b32.xlu0 %v794, 12
        %v2045 = vpop.permute.xlu0 %2044
        %2046 = vrot.lane.b32.xlu0 %v795, 12
        %v2047 = vpop.permute.xlu0 %2046
        %2048 = vrot.lane.b32.xlu0 %v796, 12
        %v2049 = vpop.permute.xlu0 %2048
        %2050 = vrot.lane.b32.xlu0 %v797, 12
        %v2051 = vpop.permute.xlu0 %2050
        %2052 = vrot.lane.b32.xlu0 %v1118, 12
        %v2053 = vpop.permute.xlu0 %2052
        %2054 = vrot.lane.b32.xlu0 %v799, 12
        %v2055 = vpop.permute.xlu0 %2054
        %2056 = vrot.lane.b32.xlu0 %v800, 12
        %v2057 = vpop.permute.xlu0 %2056
        %2058 = vrot.lane.b32.xlu0 %v801, 12
        %v2059 = vpop.permute.xlu0 %2058
        %2060 = vrot.lane.b32.xlu0 %v802, 12
        %v2061 = vpop.permute.xlu0 %2060
        %2062 = vrot.lane.b32.xlu0 %v803, 12
        %v2063 = vpop.permute.xlu0 %2062
        %2064 = vrot.lane.b32.xlu0 %v804, 12
        %v2065 = vpop.permute.xlu0 %2064
        %2066 = vrot.lane.b32.xlu0 %v805, 12
        %v2067 = vpop.permute.xlu0 %2066
        %2068 = vrot.lane.b32.xlu0 %v1119, 12
        %v2069 = vpop.permute.xlu0 %2068
        %2070 = vrot.lane.b32.xlu0 %v931, 16
        %v2071 = vpop.permute.xlu0 %2070
        %2072 = vrot.lane.b32.xlu0 %v938, 16
        %v2073 = vpop.permute.xlu0 %2072
        %2074 = vrot.lane.b32.xlu0 %v945, 16
        %v2075 = vpop.permute.xlu0 %2074
        %2076 = vrot.lane.b32.xlu0 %v952, 16
        %v2077 = vpop.permute.xlu0 %2076
        %2078 = vrot.lane.b32.xlu0 %v959, 16
        %v2079 = vpop.permute.xlu0 %2078
        %2080 = vrot.lane.b32.xlu0 %v966, 16
        %v2081 = vpop.permute.xlu0 %2080
        %2082 = vrot.lane.b32.xlu0 %v973, 16
        %v2083 = vpop.permute.xlu0 %2082
        %2084 = vrot.lane.b32.xlu0 %v1164, 16
        %v2085 = vpop.permute.xlu0 %2084
        %2086 = vrot.lane.b32.xlu0 %v987, 16
        %v2087 = vpop.permute.xlu0 %2086
        %2088 = vrot.lane.b32.xlu0 %v994, 16
        %v2089 = vpop.permute.xlu0 %2088
        %2090 = vrot.lane.b32.xlu0 %v1001, 16
        %v2091 = vpop.permute.xlu0 %2090
        %2092 = vrot.lane.b32.xlu0 %v1008, 16
        %v2093 = vpop.permute.xlu0 %2092
        %2094 = vrot.lane.b32.xlu0 %v1015, 16
        %v2095 = vpop.permute.xlu0 %2094
        %2096 = vrot.lane.b32.xlu0 %v1022, 16
        %v2097 = vpop.permute.xlu0 %2096
        %2098 = vrot.lane.b32.xlu0 %v1029, 16
        %v2099 = vpop.permute.xlu0 %2098
        %2100 = vrot.lane.b32.xlu0 %v1171, 16
        %v2101 = vpop.permute.xlu0 %2100
        %v2104 = vunpack.c.l.b16 %v730
        %v2105 = vunpack.c.l.b16 %v750
        %v2106 = vpack.c.b16 %v2104, %v1116
        %v2107 = vpack.c.b16 %v2105, %v1117
        %v2109 = vshrl.u32 %v2106, 16
        %v2111 = vshll.u32 %v2106, 16
        %v2113 = vrot.slane %v2111, 1
        %v2114 = vor.u32 %v2109, %v2113
        %v2116 = vshrl.u32 %v2107, 16
        %v2118 = vshll.u32 %v2107, 16
        %v2120 = vrot.slane %v2118, 1
        %v2121 = vor.u32 %v2116, %v2120
        %2122 = vrot.lane.b32.xlu0 %v1907, 20
        %v2123 = vpop.permute.xlu0 %2122
        %2124 = vrot.lane.b32.xlu0 %v1914, 20
        %v2125 = vpop.permute.xlu0 %2124
        %2126 = vrot.lane.b32.xlu0 %v1921, 20
        %v2127 = vpop.permute.xlu0 %2126
        %2128 = vrot.lane.b32.xlu0 %v1928, 20
        %v2129 = vpop.permute.xlu0 %2128
        %2130 = vrot.lane.b32.xlu0 %v1935, 20
        %v2131 = vpop.permute.xlu0 %2130
        %2132 = vrot.lane.b32.xlu0 %v1942, 20
        %v2133 = vpop.permute.xlu0 %2132
        %2134 = vrot.lane.b32.xlu0 %v1949, 20
        %v2135 = vpop.permute.xlu0 %2134
        %2136 = vrot.lane.b32.xlu0 %v2114, 20
        %v2137 = vpop.permute.xlu0 %2136
        %2138 = vrot.lane.b32.xlu0 %v1963, 20
        %v2139 = vpop.permute.xlu0 %2138
        %2140 = vrot.lane.b32.xlu0 %v1970, 20
        %v2141 = vpop.permute.xlu0 %2140
        %2142 = vrot.lane.b32.xlu0 %v1977, 20
        %v2143 = vpop.permute.xlu0 %2142
        %2144 = vrot.lane.b32.xlu0 %v1984, 20
        %v2145 = vpop.permute.xlu0 %2144
        %2146 = vrot.lane.b32.xlu0 %v1991, 20
        %v2147 = vpop.permute.xlu0 %2146
        %2148 = vrot.lane.b32.xlu0 %v1998, 20
        %v2149 = vpop.permute.xlu0 %2148
        %2150 = vrot.lane.b32.xlu0 %v2005, 20
        %v2151 = vpop.permute.xlu0 %2150
        %2152 = vrot.lane.b32.xlu0 %v2121, 20
        %v2153 = vpop.permute.xlu0 %2152
        %2154 = vrot.lane.b32.xlu0 %v792, 24
        %v2155 = vpop.permute.xlu0 %2154
        %2156 = vrot.lane.b32.xlu0 %v793, 24
        %v2157 = vpop.permute.xlu0 %2156
        %2158 = vrot.lane.b32.xlu0 %v794, 24
        %v2159 = vpop.permute.xlu0 %2158
        %2160 = vrot.lane.b32.xlu0 %v795, 24
        %v2161 = vpop.permute.xlu0 %2160
        %2162 = vrot.lane.b32.xlu0 %v796, 24
        %v2163 = vpop.permute.xlu0 %2162
        %2164 = vrot.lane.b32.xlu0 %v797, 24
        %v2165 = vpop.permute.xlu0 %2164
        %2166 = vrot.lane.b32.xlu0 %v1118, 24
        %v2167 = vpop.permute.xlu0 %2166
        %2168 = vrot.lane.b32.xlu0 %v1246, 24
        %v2169 = vpop.permute.xlu0 %2168
        %2170 = vrot.lane.b32.xlu0 %v800, 24
        %v2171 = vpop.permute.xlu0 %2170
        %2172 = vrot.lane.b32.xlu0 %v801, 24
        %v2173 = vpop.permute.xlu0 %2172
        %2174 = vrot.lane.b32.xlu0 %v802, 24
        %v2175 = vpop.permute.xlu0 %2174
        %2176 = vrot.lane.b32.xlu0 %v803, 24
        %v2177 = vpop.permute.xlu0 %2176
        %2178 = vrot.lane.b32.xlu0 %v804, 24
        %v2179 = vpop.permute.xlu0 %2178
        %2180 = vrot.lane.b32.xlu0 %v805, 24
        %v2181 = vpop.permute.xlu0 %2180
        %2182 = vrot.lane.b32.xlu0 %v1119, 24
        %v2183 = vpop.permute.xlu0 %2182
        %2184 = vrot.lane.b32.xlu0 %v1247, 24
        %v2185 = vpop.permute.xlu0 %2184
        %2186 = vrot.lane.b32.xlu0 %v938, 28
        %v2187 = vpop.permute.xlu0 %2186
        %2188 = vrot.lane.b32.xlu0 %v945, 28
        %v2189 = vpop.permute.xlu0 %2188
        %2190 = vrot.lane.b32.xlu0 %v952, 28
        %v2191 = vpop.permute.xlu0 %2190
        %2192 = vrot.lane.b32.xlu0 %v959, 28
        %v2193 = vpop.permute.xlu0 %2192
        %2194 = vrot.lane.b32.xlu0 %v966, 28
        %v2195 = vpop.permute.xlu0 %2194
        %2196 = vrot.lane.b32.xlu0 %v973, 28
        %v2197 = vpop.permute.xlu0 %2196
        %2198 = vrot.lane.b32.xlu0 %v1164, 28
        %v2199 = vpop.permute.xlu0 %2198
        %2200 = vrot.lane.b32.xlu0 %v1292, 28
        %v2201 = vpop.permute.xlu0 %2200
        %2202 = vrot.lane.b32.xlu0 %v994, 28
        %v2203 = vpop.permute.xlu0 %2202
        %2204 = vrot.lane.b32.xlu0 %v1001, 28
        %v2205 = vpop.permute.xlu0 %2204
        %2206 = vrot.lane.b32.xlu0 %v1008, 28
        %v2207 = vpop.permute.xlu0 %2206
        %2208 = vrot.lane.b32.xlu0 %v1015, 28
        %v2209 = vpop.permute.xlu0 %2208
        %2210 = vrot.lane.b32.xlu0 %v1022, 28
        %v2211 = vpop.permute.xlu0 %2210
        %2212 = vrot.lane.b32.xlu0 %v1029, 28
        %v2213 = vpop.permute.xlu0 %2212
        %2214 = vrot.lane.b32.xlu0 %v1171, 28
        %v2215 = vpop.permute.xlu0 %2214
        %2216 = vrot.lane.b32.xlu0 %v1299, 28
        %v2217 = vpop.permute.xlu0 %2216
        %v2220 = vunpack.c.l.b16 %v732
        %v2221 = vunpack.c.l.b16 %v752
        %v2222 = vpack.c.b16 %v2220, %v1244
        %v2223 = vpack.c.b16 %v2221, %v1245
        %v2225 = vshrl.u32 %v2222, 16
        %v2227 = vshll.u32 %v2222, 16
        %v2229 = vrot.slane %v2227, 1
        %v2230 = vor.u32 %v2225, %v2229
        %v2232 = vshrl.u32 %v2223, 16
        %v2234 = vshll.u32 %v2223, 16
        %v2236 = vrot.slane %v2234, 1
        %v2237 = vor.u32 %v2232, %v2236
        %2238 = vrot.lane.b32.xlu0 %v1914, 32
        %v2239 = vpop.permute.xlu0 %2238
        %2240 = vrot.lane.b32.xlu0 %v1921, 32
        %v2241 = vpop.permute.xlu0 %2240
        %2242 = vrot.lane.b32.xlu0 %v1928, 32
        %v2243 = vpop.permute.xlu0 %2242
        %2244 = vrot.lane.b32.xlu0 %v1935, 32
        %v2245 = vpop.permute.xlu0 %2244
        %2246 = vrot.lane.b32.xlu0 %v1942, 32
        %v2247 = vpop.permute.xlu0 %2246
        %2248 = vrot.lane.b32.xlu0 %v1949, 32
        %v2249 = vpop.permute.xlu0 %2248
        %2250 = vrot.lane.b32.xlu0 %v2114, 32
        %v2251 = vpop.permute.xlu0 %2250
        %2252 = vrot.lane.b32.xlu0 %v2230, 32
        %v2253 = vpop.permute.xlu0 %2252
        %2254 = vrot.lane.b32.xlu0 %v1970, 32
        %v2255 = vpop.permute.xlu0 %2254
        %2256 = vrot.lane.b32.xlu0 %v1977, 32
        %v2257 = vpop.permute.xlu0 %2256
        %2258 = vrot.lane.b32.xlu0 %v1984, 32
        %v2259 = vpop.permute.xlu0 %2258
        %2260 = vrot.lane.b32.xlu0 %v1991, 32
        %v2261 = vpop.permute.xlu0 %2260
        %2262 = vrot.lane.b32.xlu0 %v1998, 32
        %v2263 = vpop.permute.xlu0 %2262
        %2264 = vrot.lane.b32.xlu0 %v2005, 32
        %v2265 = vpop.permute.xlu0 %2264
        %2266 = vrot.lane.b32.xlu0 %v2121, 32
        %v2267 = vpop.permute.xlu0 %2266
        %2268 = vrot.lane.b32.xlu0 %v2237, 32
        %v2269 = vpop.permute.xlu0 %2268
        %v2272 = vsel %vm1332, %v713, %v1815
        %v2275 = vsel %vm1332, %v715, %v1817
        %v2278 = vsel %vm1332, %v717, %v1819
        %v2281 = vsel %vm1332, %v719, %v1821
        %v2284 = vsel %vm1332, %v721, %v1823
        %v2287 = vsel %vm1332, %v723, %v1825
        %v2290 = vsel %vm1332, %v725, %v1827
        %v2293 = vsel %vm1332, %v727, %v1829
        %v2296 = vsel %vm1332, %v733, %v1831
        %v2299 = vsel %vm1332, %v735, %v1833
        %v2302 = vsel %vm1332, %v737, %v1835
        %v2305 = vsel %vm1332, %v739, %v1837
        %v2308 = vsel %vm1332, %v741, %v1839
        %v2311 = vsel %vm1332, %v743, %v1841
        %v2314 = vsel %vm1332, %v745, %v1843
        %v2317 = vsel %vm1332, %v747, %v1845
        %v2319 = vsel %vm1381, %v2272, %v2007
        %v2321 = vsel %vm1381, %v2275, %v2009
        %v2323 = vsel %vm1381, %v2278, %v2011
        %v2325 = vsel %vm1381, %v2281, %v2013
        %v2327 = vsel %vm1381, %v2284, %v2015
        %v2329 = vsel %vm1381, %v2287, %v2017
        %v2331 = vsel %vm1381, %v2290, %v2019
        %v2333 = vsel %vm1381, %v2293, %v2021
        %v2335 = vsel %vm1381, %v2296, %v2023
        %v2337 = vsel %vm1381, %v2299, %v2025
        %v2339 = vsel %vm1381, %v2302, %v2027
        %v2341 = vsel %vm1381, %v2305, %v2029
        %v2343 = vsel %vm1381, %v2308, %v2031
        %v2345 = vsel %vm1381, %v2311, %v2033
        %v2347 = vsel %vm1381, %v2314, %v2035
        %v2349 = vsel %vm1381, %v2317, %v2037
        %v2351 = vsel %vm1414, %v2319, %v2039
        %v2353 = vsel %vm1414, %v2321, %v2041
        %v2355 = vsel %vm1414, %v2323, %v2043
        %v2357 = vsel %vm1414, %v2325, %v2045
        %v2359 = vsel %vm1414, %v2327, %v2047
        %v2361 = vsel %vm1414, %v2329, %v2049
        %v2363 = vsel %vm1414, %v2331, %v2051
        %v2365 = vsel %vm1414, %v2333, %v2053
        %v2367 = vsel %vm1414, %v2335, %v2055
        %v2369 = vsel %vm1414, %v2337, %v2057
        %v2371 = vsel %vm1414, %v2339, %v2059
        %v2373 = vsel %vm1414, %v2341, %v2061
        %v2375 = vsel %vm1414, %v2343, %v2063
        %v2377 = vsel %vm1414, %v2345, %v2065
        %v2379 = vsel %vm1414, %v2347, %v2067
        %v2381 = vsel %vm1414, %v2349, %v2069
        %v2383 = vsel %vm1447, %v2351, %v2071
        %v2385 = vsel %vm1447, %v2353, %v2073
        %v2387 = vsel %vm1447, %v2355, %v2075
        %v2389 = vsel %vm1447, %v2357, %v2077
        %v2391 = vsel %vm1447, %v2359, %v2079
        %v2393 = vsel %vm1447, %v2361, %v2081
        %v2395 = vsel %vm1447, %v2363, %v2083
        %v2397 = vsel %vm1447, %v2365, %v2085
        %v2399 = vsel %vm1447, %v2367, %v2087
        %v2401 = vsel %vm1447, %v2369, %v2089
        %v2403 = vsel %vm1447, %v2371, %v2091
        %v2405 = vsel %vm1447, %v2373, %v2093
        %v2407 = vsel %vm1447, %v2375, %v2095
        %v2409 = vsel %vm1447, %v2377, %v2097
        %v2411 = vsel %vm1447, %v2379, %v2099
        %v2413 = vsel %vm1447, %v2381, %v2101
        %v2415 = vsel %vm1480, %v2383, %v2123
        %v2417 = vsel %vm1480, %v2385, %v2125
        %v2419 = vsel %vm1480, %v2387, %v2127
        %v2421 = vsel %vm1480, %v2389, %v2129
        %v2423 = vsel %vm1480, %v2391, %v2131
        %v2425 = vsel %vm1480, %v2393, %v2133
        %v2427 = vsel %vm1480, %v2395, %v2135
        %v2429 = vsel %vm1480, %v2397, %v2137
        %v2431 = vsel %vm1480, %v2399, %v2139
        %v2433 = vsel %vm1480, %v2401, %v2141
        %v2435 = vsel %vm1480, %v2403, %v2143
        %v2437 = vsel %vm1480, %v2405, %v2145
        %v2439 = vsel %vm1480, %v2407, %v2147
        %v2441 = vsel %vm1480, %v2409, %v2149
        %v2443 = vsel %vm1480, %v2411, %v2151
        %v2445 = vsel %vm1480, %v2413, %v2153
        %v2447 = vsel %vm1513, %v2415, %v2155
        %v2449 = vsel %vm1513, %v2417, %v2157
        %v2451 = vsel %vm1513, %v2419, %v2159
        %v2453 = vsel %vm1513, %v2421, %v2161
        %v2455 = vsel %vm1513, %v2423, %v2163
        %v2457 = vsel %vm1513, %v2425, %v2165
        %v2459 = vsel %vm1513, %v2427, %v2167
        %v2461 = vsel %vm1513, %v2429, %v2169
        %v2463 = vsel %vm1513, %v2431, %v2171
        %v2465 = vsel %vm1513, %v2433, %v2173
        %v2467 = vsel %vm1513, %v2435, %v2175
        %v2469 = vsel %vm1513, %v2437, %v2177
        %v2471 = vsel %vm1513, %v2439, %v2179
        %v2473 = vsel %vm1513, %v2441, %v2181
        %v2475 = vsel %vm1513, %v2443, %v2183
        %v2477 = vsel %vm1513, %v2445, %v2185
        %v2479 = vsel %vm1546, %v2447, %v2187
        %v2481 = vsel %vm1546, %v2449, %v2189
        %v2483 = vsel %vm1546, %v2451, %v2191
        %v2485 = vsel %vm1546, %v2453, %v2193
        %v2487 = vsel %vm1546, %v2455, %v2195
        %v2489 = vsel %vm1546, %v2457, %v2197
        %v2491 = vsel %vm1546, %v2459, %v2199
        %v2493 = vsel %vm1546, %v2461, %v2201
        %v2495 = vsel %vm1546, %v2463, %v2203
        %v2497 = vsel %vm1546, %v2465, %v2205
        %v2499 = vsel %vm1546, %v2467, %v2207
        %v2501 = vsel %vm1546, %v2469, %v2209
        %v2503 = vsel %vm1546, %v2471, %v2211
        %v2505 = vsel %vm1546, %v2473, %v2213
        %v2507 = vsel %vm1546, %v2475, %v2215
        %v2509 = vsel %vm1546, %v2477, %v2217
        %v2511 = vsel %vm1579, %v2479, %v2239
        %v2513 = vsel %vm1579, %v2481, %v2241
        %v2515 = vsel %vm1579, %v2483, %v2243
        %v2517 = vsel %vm1579, %v2485, %v2245
        %v2519 = vsel %vm1579, %v2487, %v2247
        %v2521 = vsel %vm1579, %v2489, %v2249
        %v2523 = vsel %vm1579, %v2491, %v2251
        %v2525 = vsel %vm1579, %v2493, %v2253
        %v2527 = vsel %vm1579, %v2495, %v2255
        %v2529 = vsel %vm1579, %v2497, %v2257
        %v2531 = vsel %vm1579, %v2499, %v2259
        %v2533 = vsel %vm1579, %v2501, %v2261
        %v2535 = vsel %vm1579, %v2503, %v2263
        %v2537 = vsel %vm1579, %v2505, %v2265
        %v2539 = vsel %vm1579, %v2507, %v2267
        %v2541 = vsel %vm1579, %v2509, %v2269
        %v2542 = vsel %vm1612, %v2511, 1065369472
        %v2543 = vsel %vm1612, %v2513, 1065369472
        %v2544 = vsel %vm1612, %v2515, 1065369472
        %v2545 = vsel %vm1612, %v2517, 1065369472
        %v2546 = vsel %vm1612, %v2519, 1065369472
        %v2547 = vsel %vm1612, %v2521, 1065369472
        %v2548 = vsel %vm1612, %v2523, 1065369472
        %v2549 = vsel %vm1612, %v2525, 1065369472
        %v2550 = vsel %vm1612, %v2527, 1065369472
        %v2551 = vsel %vm1612, %v2529, 1065369472
        %v2552 = vsel %vm1612, %v2531, 1065369472
        %v2553 = vsel %vm1612, %v2533, 1065369472
        %v2554 = vsel %vm1612, %v2535, 1065369472
        %v2555 = vsel %vm1612, %v2537, 1065369472
        %v2556 = vsel %vm1612, %v2539, 1065369472
        %v2557 = vsel %vm1612, %v2541, 1065369472
        %v2574 = vunpack.c.l.b16 %v2542
        %v2575 = vunpack.c.l.b16 %v2543
        %v2576 = vunpack.c.l.b16 %v2544
        %v2577 = vunpack.c.l.b16 %v2545
        %v2578 = vunpack.c.l.b16 %v2546
        %v2579 = vunpack.c.l.b16 %v2547
        %v2580 = vunpack.c.l.b16 %v2548
        %v2581 = vunpack.c.l.b16 %v2549
        %v2582 = vunpack.c.l.b16 %v2550
        %v2583 = vunpack.c.l.b16 %v2551
        %v2584 = vunpack.c.l.b16 %v2552
        %v2585 = vunpack.c.l.b16 %v2553
        %v2586 = vunpack.c.l.b16 %v2554
        %v2587 = vunpack.c.l.b16 %v2555
        %v2588 = vunpack.c.l.b16 %v2556
        %v2589 = vunpack.c.l.b16 %v2557
        %v2590 = vpack.c.b16 %v2575, %v2574
        %v2591 = vpack.c.b16 %v2577, %v2576
        %v2592 = vpack.c.b16 %v2579, %v2578
        %v2593 = vpack.c.b16 %v2581, %v2580
        %v2594 = vpack.c.b16 %v2583, %v2582
        %v2595 = vpack.c.b16 %v2585, %v2584
        %v2596 = vpack.c.b16 %v2587, %v2586
        %v2597 = vpack.c.b16 %v2589, %v2588
        %v2599 = vsel %vm1685, %v2590, 0
        %v2602 = vsel %vm1685, %v2591, 0
        %v2605 = vsel %vm1685, %v2592, 0
        %v2608 = vsel %vm1685, %v2593, 0
        %v2611 = vsel %vm1685, %v2594, 0
        %v2614 = vsel %vm1685, %v2595, 0
        %v2617 = vsel %vm1685, %v2596, 0
        %v2620 = vsel %vm1685, %v2597, 0
        %2622 = vmatprep.subr.bf16.mxu0 0
        %2623 = vmatpush1.bf16.msra.mxu0 0
        %2624 = vmatprep.subr.bf16.mxu0 0
        %2625 = vmatpush1.bf16.msra.mxu0 0
        %2626 = vmatprep.subr.bf16.mxu0 0
        %2627 = vmatpush1.bf16.msra.mxu0 0
        %2628 = vmatprep.subr.bf16.mxu0 0
        %2629 = vmatpush1.bf16.msra.mxu0 0
        %2630 = vmatprep.subr.bf16.mxu0 0
        %2631 = vmatpush1.bf16.msra.mxu0 0
        %2632 = vmatprep.subr.bf16.mxu0 0
        %2633 = vmatpush1.bf16.msra.mxu0 %v1715
        %2634 = vmatprep.subr.bf16.mxu0 0
        %2635 = vmatpush1.bf16.msra.mxu0 %v1681
        %2636 = vmatprep.subr.bf16.mxu0 0
        %2637 = vmatpush1.bf16.msra.mxu0 %v1680
        %2638 = vmatprep.subr.bf16.mxu0 0
        %2639 = vmatpush2.bf16.msra.mxu0 0
        %2640 = vmatprep.subr.bf16.mxu0 0
        %2641 = vmatpush2.bf16.msra.mxu0 0
        %2642 = vmatprep.subr.bf16.mxu0 0
        %2643 = vmatpush2.bf16.msra.mxu0 0
        %2644 = vmatprep.subr.bf16.mxu0 0
        %2645 = vmatpush2.bf16.msra.mxu0 0
        %2646 = vmatprep.subr.bf16.mxu0 0
        %2647 = vmatpush2.bf16.msra.mxu0 0
        %2648 = vmatprep.subr.bf16.mxu0 0
        %2649 = vmatpush2.bf16.msra.mxu0 0
        %2650 = vmatprep.subr.bf16.mxu0 0
        %2651 = vmatpush2.bf16.msra.mxu0 0
        %2652 = vmatprep.subr.bf16.mxu0 0
        %2653 = vmatpush2.bf16.msra.mxu0 0
        %2654 = vmatprep.mubr.bf16.mxu0 0
        %2655 = vmatmul.mubr.bf16.gmra.mxu0 %v2599
        %v2656 = vpop.f32.mrf.mxu0
        %v2657 = vadd.f32 0.0, %v2656
        %v2658 = vpop.f32.mrf.mxu0
        %v2659 = vpop.f32.mrf.mxu0
        %v2660 = vadd.f32 0.0, %v2659
        %v2661 = vpop.f32.mrf.mxu0
        %2662 = vmatprep.mubr.bf16.mxu0 0
        %2663 = vmatmul.mubr.bf16.gmra.mxu0 %v2602
        %v2664 = vpop.f32.mrf.mxu0
        %v2665 = vadd.f32 0.0, %v2664
        %v2666 = vpop.f32.mrf.mxu0
        %v2667 = vpop.f32.mrf.mxu0
        %v2668 = vadd.f32 0.0, %v2667
        %v2669 = vpop.f32.mrf.mxu0
        %2670 = vmatprep.mubr.bf16.mxu0 0
        %2671 = vmatmul.mubr.bf16.gmra.mxu0 %v2605
        %v2672 = vpop.f32.mrf.mxu0
        %v2673 = vadd.f32 0.0, %v2672
        %v2674 = vpop.f32.mrf.mxu0
        %v2675 = vpop.f32.mrf.mxu0
        %v2676 = vadd.f32 0.0, %v2675
        %v2677 = vpop.f32.mrf.mxu0
        %2678 = vmatprep.mubr.bf16.mxu0 0
        %2679 = vmatmul.mubr.bf16.gmra.mxu0 %v2608
        %v2680 = vpop.f32.mrf.mxu0
        %v2681 = vadd.f32 0.0, %v2680
        %v2682 = vpop.f32.mrf.mxu0
        %v2683 = vpop.f32.mrf.mxu0
        %v2684 = vadd.f32 0.0, %v2683
        %v2685 = vpop.f32.mrf.mxu0
        %2686 = vmatprep.mubr.bf16.mxu0 0
        %2687 = vmatmul.mubr.bf16.gmra.mxu0 %v2611
        %v2688 = vpop.f32.mrf.mxu0
        %v2689 = vadd.f32 0.0, %v2688
        %v2690 = vpop.f32.mrf.mxu0
        %v2691 = vpop.f32.mrf.mxu0
        %v2692 = vadd.f32 0.0, %v2691
        %v2693 = vpop.f32.mrf.mxu0
        %2694 = vmatprep.mubr.bf16.mxu0 0
        %2695 = vmatmul.mubr.bf16.gmra.mxu0 %v2614
        %v2696 = vpop.f32.mrf.mxu0
        %v2697 = vadd.f32 0.0, %v2696
        %v2698 = vpop.f32.mrf.mxu0
        %v2699 = vpop.f32.mrf.mxu0
        %v2700 = vadd.f32 0.0, %v2699
        %v2701 = vpop.f32.mrf.mxu0
        %2702 = vmatprep.mubr.bf16.mxu0 0
        %2703 = vmatmul.mubr.bf16.gmra.mxu0 %v2617
        %v2704 = vpop.f32.mrf.mxu0
        %v2705 = vadd.f32 0.0, %v2704
        %v2706 = vpop.f32.mrf.mxu0
        %v2707 = vpop.f32.mrf.mxu0
        %v2708 = vadd.f32 0.0, %v2707
        %v2709 = vpop.f32.mrf.mxu0
        %2710 = vmatprep.mubr.bf16.mxu0 0
        %2711 = vmatmul.mubr.bf16.gmra.mxu0 %v2620
        %v2712 = vpop.f32.mrf.mxu0
        %v2713 = vadd.f32 0.0, %v2712
        %v2714 = vpop.f32.mrf.mxu0
        %v2715 = vpop.f32.mrf.mxu0
        %v2716 = vadd.f32 0.0, %v2715
        %v2717 = vpop.f32.mrf.mxu0
        %2718 = vdwg.mxu0
        %v2719 = vld [vmem:[%s3] sm:$0x1]
        %v2720 = vld [vmem:[%s4] sm:$0x1]
        %vm2721 = vcmp.gt.f32.partialorder %v1752, 0.0
        %vm2722 = vcmp.gt.f32.partialorder %v1755, 0.0
        %vm2723 = vcmp.gt.f32.partialorder %v1760, 0.0
        %vm2724 = vcmp.gt.f32.partialorder %v1763, 0.0
        %vm2725 = vcmp.gt.f32.partialorder %v1768, 0.0
        %vm2726 = vcmp.gt.f32.partialorder %v1771, 0.0
        %vm2727 = vcmp.gt.f32.partialorder %v1776, 0.0
        %vm2728 = vcmp.gt.f32.partialorder %v1779, 0.0
        %vm2729 = vcmp.gt.f32.partialorder %v1784, 0.0
        %vm2730 = vcmp.gt.f32.partialorder %v1787, 0.0
        %vm2731 = vcmp.gt.f32.partialorder %v1792, 0.0
        %vm2732 = vcmp.gt.f32.partialorder %v1795, 0.0
        %vm2733 = vcmp.gt.f32.partialorder %v1800, 0.0
        %vm2734 = vcmp.gt.f32.partialorder %v1803, 0.0
        %vm2735 = vcmp.gt.f32.partialorder %v1808, 0.0
        %vm2736 = vcmp.gt.f32.partialorder %v1811, 0.0
        %v2737 = vmul.f32 %v1752, 0.01
        %v2738 = vmul.f32 %v1755, 0.01
        %v2739 = vmul.f32 %v1760, 0.01
        %v2740 = vmul.f32 %v1763, 0.01
        %v2741 = vmul.f32 %v1768, 0.01
        %v2742 = vmul.f32 %v1771, 0.01
        %v2743 = vmul.f32 %v1776, 0.01
        %v2744 = vmul.f32 %v1779, 0.01
        %v2745 = vmul.f32 %v1784, 0.01
        %v2746 = vmul.f32 %v1787, 0.01
        %v2747 = vmul.f32 %v1792, 0.01
        %v2748 = vmul.f32 %v1795, 0.01
        %v2749 = vmul.f32 %v1800, 0.01
        %v2750 = vmul.f32 %v1803, 0.01
        %v2751 = vmul.f32 %v1808, 0.01
        %v2752 = vmul.f32 %v1811, 0.01
        %v2753 = vsel %vm2721, %v1752, %v2737
        %v2754 = vsel %vm2722, %v1755, %v2738
        %v2755 = vsel %vm2723, %v1760, %v2739
        %v2756 = vsel %vm2724, %v1763, %v2740
        %v2757 = vsel %vm2725, %v1768, %v2741
        %v2758 = vsel %vm2726, %v1771, %v2742
        %v2759 = vsel %vm2727, %v1776, %v2743
        %v2760 = vsel %vm2728, %v1779, %v2744
        %v2761 = vsel %vm2729, %v1784, %v2745
        %v2762 = vsel %vm2730, %v1787, %v2746
        %v2763 = vsel %vm2731, %v1792, %v2747
        %v2764 = vsel %vm2732, %v1795, %v2748
        %v2765 = vsel %vm2733, %v1800, %v2749
        %v2766 = vsel %vm2734, %v1803, %v2750
        %v2767 = vsel %vm2735, %v1808, %v2751
        %v2768 = vsel %vm2736, %v1811, %v2752
        %v2770 = vlaneseq
        %v2771 = vshrl.u32 %v2770, 7
        %v2772 = vsub.s32 0, %v2771
        %v2773 = vrot.slane %v2719, %v2772
        %v2775 = vmul.f32 %v2753, %v2773
        %v2776 = vmul.f32 %v2754, %v2773
        %v2777 = vmul.f32 %v2755, %v2773
        %v2778 = vmul.f32 %v2756, %v2773
        %v2779 = vmul.f32 %v2757, %v2773
        %v2780 = vmul.f32 %v2758, %v2773
        %v2781 = vmul.f32 %v2759, %v2773
        %v2782 = vmul.f32 %v2760, %v2773
        %v2783 = vmul.f32 %v2761, %v2773
        %v2784 = vmul.f32 %v2762, %v2773
        %v2785 = vmul.f32 %v2763, %v2773
        %v2786 = vmul.f32 %v2764, %v2773
        %v2787 = vmul.f32 %v2765, %v2773
        %v2788 = vmul.f32 %v2766, %v2773
        %v2789 = vmul.f32 %v2767, %v2773
        %v2790 = vmul.f32 %v2768, %v2773
        %v2792 = vlaneseq
        %v2793 = vshrl.u32 %v2792, 7
        %v2794 = vsub.s32 0, %v2793
        %v2795 = vrot.slane %v2720, %v2794
        %v2797 = vadd.f32 %v2775, %v2795
        %v2798 = vadd.f32 %v2776, %v2795
        %v2799 = vadd.f32 %v2777, %v2795
        %v2800 = vadd.f32 %v2778, %v2795
        %v2801 = vadd.f32 %v2779, %v2795
        %v2802 = vadd.f32 %v2780, %v2795
        %v2803 = vadd.f32 %v2781, %v2795
        %v2804 = vadd.f32 %v2782, %v2795
        %v2805 = vadd.f32 %v2783, %v2795
        %v2806 = vadd.f32 %v2784, %v2795
        %v2807 = vadd.f32 %v2785, %v2795
        %v2808 = vadd.f32 %v2786, %v2795
        %v2809 = vadd.f32 %v2787, %v2795
        %v2810 = vadd.f32 %v2788, %v2795
        %v2811 = vadd.f32 %v2789, %v2795
        %v2812 = vadd.f32 %v2790, %v2795
        %vm2813 = vcmp.gt.f32.partialorder %v2657, 0.0
        %vm2814 = vcmp.gt.f32.partialorder %v2660, 0.0
        %vm2815 = vcmp.gt.f32.partialorder %v2665, 0.0
        %vm2816 = vcmp.gt.f32.partialorder %v2668, 0.0
        %vm2817 = vcmp.gt.f32.partialorder %v2673, 0.0
        %vm2818 = vcmp.gt.f32.partialorder %v2676, 0.0
        %vm2819 = vcmp.gt.f32.partialorder %v2681, 0.0
        %vm2820 = vcmp.gt.f32.partialorder %v2684, 0.0
        %vm2821 = vcmp.gt.f32.partialorder %v2689, 0.0
        %vm2822 = vcmp.gt.f32.partialorder %v2692, 0.0
        %vm2823 = vcmp.gt.f32.partialorder %v2697, 0.0
        %vm2824 = vcmp.gt.f32.partialorder %v2700, 0.0
        %vm2825 = vcmp.gt.f32.partialorder %v2705, 0.0
        %vm2826 = vcmp.gt.f32.partialorder %v2708, 0.0
        %vm2827 = vcmp.gt.f32.partialorder %v2713, 0.0
        %vm2828 = vcmp.gt.f32.partialorder %v2716, 0.0
        %v2829 = vmul.f32 %v2657, 0.01
        %v2830 = vmul.f32 %v2660, 0.01
        %v2831 = vmul.f32 %v2665, 0.01
        %v2832 = vmul.f32 %v2668, 0.01
        %v2833 = vmul.f32 %v2673, 0.01
        %v2834 = vmul.f32 %v2676, 0.01
        %v2835 = vmul.f32 %v2681, 0.01
        %v2836 = vmul.f32 %v2684, 0.01
        %v2837 = vmul.f32 %v2689, 0.01
        %v2838 = vmul.f32 %v2692, 0.01
        %v2839 = vmul.f32 %v2697, 0.01
        %v2840 = vmul.f32 %v2700, 0.01
        %v2841 = vmul.f32 %v2705, 0.01
        %v2842 = vmul.f32 %v2708, 0.01
        %v2843 = vmul.f32 %v2713, 0.01
        %v2844 = vmul.f32 %v2716, 0.01
        %v2845 = vsel %vm2813, %v2657, %v2829
        %v2846 = vsel %vm2814, %v2660, %v2830
        %v2847 = vsel %vm2815, %v2665, %v2831
        %v2848 = vsel %vm2816, %v2668, %v2832
        %v2849 = vsel %vm2817, %v2673, %v2833
        %v2850 = vsel %vm2818, %v2676, %v2834
        %v2851 = vsel %vm2819, %v2681, %v2835
        %v2852 = vsel %vm2820, %v2684, %v2836
        %v2853 = vsel %vm2821, %v2689, %v2837
        %v2854 = vsel %vm2822, %v2692, %v2838
        %v2855 = vsel %vm2823, %v2697, %v2839
        %v2856 = vsel %vm2824, %v2700, %v2840
        %v2857 = vsel %vm2825, %v2705, %v2841
        %v2858 = vsel %vm2826, %v2708, %v2842
        %v2859 = vsel %vm2827, %v2713, %v2843
        %v2860 = vsel %vm2828, %v2716, %v2844
        %v2861 = vmul.f32 %v2845, %v2773
        %v2862 = vmul.f32 %v2846, %v2773
        %v2863 = vmul.f32 %v2847, %v2773
        %v2864 = vmul.f32 %v2848, %v2773
        %v2865 = vmul.f32 %v2849, %v2773
        %v2866 = vmul.f32 %v2850, %v2773
        %v2867 = vmul.f32 %v2851, %v2773
        %v2868 = vmul.f32 %v2852, %v2773
        %v2869 = vmul.f32 %v2853, %v2773
        %v2870 = vmul.f32 %v2854, %v2773
        %v2871 = vmul.f32 %v2855, %v2773
        %v2872 = vmul.f32 %v2856, %v2773
        %v2873 = vmul.f32 %v2857, %v2773
        %v2874 = vmul.f32 %v2858, %v2773
        %v2875 = vmul.f32 %v2859, %v2773
        %v2876 = vmul.f32 %v2860, %v2773
        %v2877 = vadd.f32 %v2861, %v2795
        %v2878 = vadd.f32 %v2862, %v2795
        %v2879 = vadd.f32 %v2863, %v2795
        %v2880 = vadd.f32 %v2864, %v2795
        %v2881 = vadd.f32 %v2865, %v2795
        %v2882 = vadd.f32 %v2866, %v2795
        %v2883 = vadd.f32 %v2867, %v2795
        %v2884 = vadd.f32 %v2868, %v2795
        %v2885 = vadd.f32 %v2869, %v2795
        %v2886 = vadd.f32 %v2870, %v2795
        %v2887 = vadd.f32 %v2871, %v2795
        %v2888 = vadd.f32 %v2872, %v2795
        %v2889 = vadd.f32 %v2873, %v2795
        %v2890 = vadd.f32 %v2874, %v2795
        %v2891 = vadd.f32 %v2875, %v2795
        %v2892 = vadd.f32 %v2876, %v2795
        %v2893 = vmax.f32 %v2797, %v2877
        %v2894 = vmax.f32 %v2798, %v2878
        %v2895 = vmax.f32 %v2799, %v2879
        %v2896 = vmax.f32 %v2800, %v2880
        %v2897 = vmax.f32 %v2801, %v2881
        %v2898 = vmax.f32 %v2802, %v2882
        %v2899 = vmax.f32 %v2803, %v2883
        %v2900 = vmax.f32 %v2804, %v2884
        %v2901 = vmax.f32 %v2805, %v2885
        %v2902 = vmax.f32 %v2806, %v2886
        %v2903 = vmax.f32 %v2807, %v2887
        %v2904 = vmax.f32 %v2808, %v2888
        %v2905 = vmax.f32 %v2809, %v2889
        %v2906 = vmax.f32 %v2810, %v2890
        %v2907 = vmax.f32 %v2811, %v2891
        %v2908 = vmax.f32 %v2812, %v2892
        %2909 = vst [vmem:[%s666] sm:$0xff] %v2893
        %2910 = vst [vmem:[%s666 + $0x8] sm:$0xff] %v2894
        %2911 = vst [vmem:[%s666 + $0x10] sm:$0xff] %v2895
        %2912 = vst [vmem:[%s666 + $0x18] sm:$0xff] %v2896
        %2913 = vst [vmem:[%s666 + $0x20] sm:$0xff] %v2897
        %2914 = vst [vmem:[%s666 + $0x28] sm:$0xff] %v2898
        %2915 = vst [vmem:[%s666 + $0x30] sm:$0xff] %v2899
        %2916 = vst [vmem:[%s666 + $0x38] sm:$0xff] %v2900
        %2917 = vst [vmem:[%s666 + $0x40] sm:$0xff] %v2901
        %2918 = vst [vmem:[%s666 + $0x48] sm:$0xff] %v2902
        %2919 = vst [vmem:[%s666 + $0x50] sm:$0xff] %v2903
        %2920 = vst [vmem:[%s666 + $0x58] sm:$0xff] %v2904
        %2921 = vst [vmem:[%s666 + $0x60] sm:$0xff] %v2905
        %2922 = vst [vmem:[%s666 + $0x68] sm:$0xff] %v2906
        %2923 = vst [vmem:[%s666 + $0x70] sm:$0xff] %v2907
        %2924 = vst [vmem:[%s666 + $0x78] sm:$0xff] %v2908
        %s2925 = sand.u32 %s160, 1
        %s2926 = scalar_lea.sflag [#allocation5], %s2925
        %s2927 = sand.u32 %s160, 1
        %s2928 = smul.addr %s2927, 128
        %s2929 = scalar_lea.vmem [#allocation4], %s2928
        // Predicated region
        $region123: #{tpu_custom_call.1} parent=113 // pred_check
          %p2930 = pneg %p170
        $region124: #{tpu_custom_call.1} parent=113 // pred_check_branch
          %2932 = sbr.rel (%p2930) target = $region126
        $region125: #{tpu_custom_call.1} parent=113 // pred_region
          #allocation7 [shape = 'u32[6]{0}', space=smem, size = 0x18, scoped, tag = 'DMA stride descriptor']
          %s2933 = smul.u32 2, %s23
          %s2934 = smul.u32 8, %s24
          %s2936 = ssub.s32 2048, 2048
          %2937 = vsyncadd %s2926, %s2936
          %s2938 = smul.addr %s2933, 16
          %s2939 = sadd.s32 %s2934, %s2938
          %s2940 = smul.addr %s2939, 128
          %s2941 = scalar_lea.hbm %s5, %s2940
          %s2943 = sshll.u32 1, 14
          %s2944 = sxor.u32 4294967295, %s2943
          %s2947 = sshll.u32 7, 18
          %s2948 = sxor.u32 4294967295, %s2947
          %s2949 = sand.u32 0, %s2948
          %s2951 = sor.u32 %s2949, 0
          %s2952 = sshll.u32 %s2929, 4
          %s2953 = int_to_ptr.vmem [resolvable:$true] %s2952
          %2959 = sst [smem:[#allocation7]] 1024
          %s2960 = scalar_lea.smem [#allocation7], 1
          %2961 = sst [smem:[%s2960]] 2048
          %s2962 = scalar_lea.smem [#allocation7], 2
          %2963 = sst [smem:[%s2962]] 8
          %s2964 = scalar_lea.smem [#allocation7], 3
          %2965 = sst [smem:[%s2964]] 128
          %s2966 = scalar_lea.smem [#allocation7], 4
          %2967 = sst [smem:[%s2966]] 128
          %s2968 = scalar_lea.smem [#allocation7], 5
          %2969 = sst [smem:[%s2968]] 8
          %2971 = dma.general %s2953, 2048, %s2941, %s2926, 131072, [#allocation7], %s2951, 0
        $region126: #{tpu_custom_call.1} parent=113 // pred_fallthru
          _
      $region114: #{tpu_custom_call.1} parent=5 // pred_fallthru
        _
      %p2972 = scmp.le.s32.totalorder 2, %s14
      // Predicated region
      $region127: #{tpu_custom_call.1} parent=5 // pred_check
        %p2973 = pneg %p2972
      $region128: #{tpu_custom_call.1} parent=5 // pred_check_branch
        %2975 = sbr.rel (%p2973) target = $region130
      $region129: #{tpu_custom_call.1} parent=5 // pred_region
        %s2976 = ssub.s32 %s14, 2
        // Predicated region
        $region131: #{tpu_custom_call.1} parent=129 // pred_check
          %p2977 = pneg %p176
        $region132: #{tpu_custom_call.1} parent=129 // pred_check_branch
          %2979 = sbr.rel (%p2977) target = $region134
        $region133: #{tpu_custom_call.1} parent=129 // pred_region
          %s2980 = sand.u32 %s161, 1
          %s2981 = scalar_lea.sflag [#allocation5], %s2980
          %s2982 = sand.u32 %s161, 1
          %s2983 = smul.addr %s2982, 128
          %s2984 = scalar_lea.vmem [#allocation4], %s2983
          %2985 = dma.done %s2981, 2048
        $region134: #{tpu_custom_call.1} parent=129 // pred_fallthru
          _
      $region130: #{tpu_custom_call.1} parent=5 // pred_fallthru
        _
    $region6: #{tpu_custom_call.1} parent=1 // loop_footer
      %s18 = sadd.s32 1, %s14
    $region7: #{tpu_custom_call.1} parent=1 // loop_footer_branch
      %13 = sbr.rel target = $region3
    $region8: #{tpu_custom_call.1} parent=1 // loop_exit
      _
    %2986 = vsyncpa [#allocation5], 1
    %s2987 = scalar_lea.sflag [#allocation5], 1
    %2988 = vsyncpa %s2987, 1

</llo_original>
